<compile_context>
chip_gen: v7x
topology: tpu7x:2x2x1
jax: 0.10.0
libtpu: 0.0.40
codegen_flags: <defaults>
</compile_context>

<pallas_src>
import jax
import jax.numpy as jnp
from jax.experimental import pallas as pl
from jax.experimental.pallas import tpu as pltpu


_MID = 128  # lane-dense padding for the 32-wide layer-3 output / layer-4 input


def _round_up(x, m):
    return ((x + m - 1) // m) * m


def _mlp_kernel(x_ref,
                w1_ref, b1_ref,
                w2_ref, b2_ref,
                w3_ref, b3_ref,
                w4_ref, b4_ref,
                o_ref):
    """Fused 4-layer MLP: (Conv1d k=1 + folded BN + ReLU) x3, then linear.

    Matmuls run in bf16 on the MXU with f32 accumulation; bias add + ReLU stay
    in f32 (v5e VPU has no bf16). The final (tile, 128) result is transposed on
    the XLU and stored lane-dense as (out_sub, tile) so HBM writeback is tiny.
    """
    # Hoist bias loads (f32 row vectors); they broadcast in the adds below.
    b1 = b1_ref[...]
    b2 = b2_ref[...]
    b3 = b3_ref[...]
    b4 = b4_ref[...]

    x = x_ref[...]
    if x.dtype != jnp.bfloat16:           # trace-time branch; no-op for bf16 inputs
        x = x.astype(jnp.bfloat16)

    h = jnp.dot(x, w1_ref[...], preferred_element_type=jnp.float32) + b1
    h = jnp.maximum(h, 0.0)

    h = jnp.dot(h.astype(jnp.bfloat16), w2_ref[...],
                preferred_element_type=jnp.float32) + b2
    h = jnp.maximum(h, 0.0)

    h = jnp.dot(h.astype(jnp.bfloat16), w3_ref[...],
                preferred_element_type=jnp.float32) + b3
    h = jnp.maximum(h, 0.0)

    h = jnp.dot(h.astype(jnp.bfloat16), w4_ref[...],
                preferred_element_type=jnp.float32) + b4

    ht = h.T                               # (MID, tile): XLU transpose, lanes dense
    o_ref[...] = ht[:o_ref.shape[0], :].astype(o_ref.dtype)


def init_params(key, input_dim, output_dim=3, eps=1e-5):
    """Deterministic synthetic Conv1d(k=1) params with eval-mode BN folded in.

    Returns list of (W, b): W of shape (C_in, C_out) f32, b of shape (1, C_out) f32.
    """
    dims = [input_dim, 256, 256, 32, output_dim]
    params = []
    for i in range(4):
        cin, cout = dims[i], dims[i + 1]
        key, k_w, k_b, k_g, k_beta = jax.random.split(key, 5)
        bound = 1.0 / (cin ** 0.5)
        w = jax.random.uniform(k_w, (cout, cin), jnp.float32, -bound, bound)
        b = jax.random.uniform(k_b, (cout,), jnp.float32, -bound, bound)
        if i < 3:
            # BatchNorm1d (eval mode) fold: y = (z - mean)/sqrt(var+eps)*gamma + beta
            gamma = 1.0 + 0.1 * jax.random.normal(k_g, (cout,), jnp.float32)
            beta = 0.1 * jax.random.normal(k_beta, (cout,), jnp.float32)
            run_mean = jnp.zeros((cout,), jnp.float32)
            run_var = jnp.ones((cout,), jnp.float32)
            s = gamma / jnp.sqrt(run_var + eps)
            t = beta - run_mean * s
            w = w * s[:, None]
            b = b * s + t
        params.append((jnp.asarray(w.T), jnp.asarray(b.reshape(1, cout))))
    return params


def re_residual_net_forward(concat_feature, params, *, tile_rows=2048):
    """concat_feature: (B, N, input_dim) -> (B, N, output_dim)."""
    B, N, D = concat_feature.shape
    rows = B * N

    (w1, b1), (w2, b2), (w3, b3), (w4, b4) = params
    out_dim = w4.shape[1]
    out_sub = _round_up(out_dim, 8)        # sublane-aligned transposed output rows
    h3_w = w3.shape[1]                     # 32

    # --- weight prep: bf16 for the MXU; pad 32-wide dims to 128 (lane-dense h3).
    # Zero pads are exact: relu(0 + 0) = 0, and padded K rows of w4 are zero.
    w1b = w1.astype(jnp.bfloat16)
    w2b = w2.astype(jnp.bfloat16)
    w3p = jnp.zeros((w3.shape[0], _MID), jnp.bfloat16).at[:, :h3_w].set(
        w3.astype(jnp.bfloat16))
    b3p = jnp.zeros((1, _MID), jnp.float32).at[:, :h3_w].set(b3.astype(jnp.float32))
    w4p = jnp.zeros((_MID, _MID), jnp.bfloat16).at[:h3_w, :out_dim].set(
        w4.astype(jnp.bfloat16))
    b4p = jnp.zeros((1, _MID), jnp.float32).at[:, :out_dim].set(b4.astype(jnp.float32))
    b1f = b1.astype(jnp.float32)
    b2f = b2.astype(jnp.float32)

    # --- row tiling: multiple of 256, aim for >= ~8 grid steps (v7x dual TC),
    # never pad tiny inputs up to one huge tile.
    assert tile_rows % 256 == 0, "row tile must be a multiple of 256"
    tile = min(tile_rows, max(256, _round_up(-(-rows // 8), 256)))
    rows_pad = _round_up(rows, tile)
    grid = rows_pad // tile

    x = concat_feature.reshape(rows, D)
    if rows_pad != rows:
        x = jnp.pad(x, ((0, rows_pad - rows), (0, 0)))
    x_itemsize = jnp.dtype(x.dtype).itemsize

    # --- cost estimate (advisory, for XLA scheduling around the call).
    weight_bytes = (w1b.size + w2b.size + w3p.size + w4p.size) * 2 \
                 + (b1f.size + b2f.size + b3p.size + b4p.size) * 4
    flops = 2 * rows_pad * (D * 256 + 256 * 256 + 256 * _MID + _MID * _MID)
    bytes_accessed = rows_pad * D * x_itemsize + out_sub * rows_pad * 4 + weight_bytes
    cost = pl.CostEstimate(flops=flops, transcendentals=0,
                           bytes_accessed=bytes_accessed)

    # --- explicit VMEM budget for the larger tile (stay well under v7x 64 MiB).
    per_step = (2 * tile * D * x_itemsize            # input, double-buffered
                + 2 * out_sub * tile * 4             # output, double-buffered
                + 2 * weight_bytes                   # resident weights (x2 margin)
                + tile * (2 * (256 * 4 + 256 * 2)    # h1/h2 f32 + bf16 casts
                          + 2 * (_MID * 4) + _MID * 2  # h3/h4 f32 + h3 bf16
                          + _MID * 4))               # transposed result
    vmem_limit = int(min(56 * 2**20, max(32 * 2**20, 2 * per_step)))

    def row_spec(c):
        return pl.BlockSpec((tile, c), lambda i: (i, 0))

    def full_spec(arr):
        # Constant index_map: weights/biases stay resident across grid steps.
        return pl.BlockSpec(arr.shape, lambda i: (0, 0))

    out_t = pl.pallas_call(
        _mlp_kernel,
        out_shape=jax.ShapeDtypeStruct((out_sub, rows_pad), concat_feature.dtype),
        grid_spec=pltpu.PrefetchScalarGridSpec(
            num_scalar_prefetch=0,
            grid=(grid,),
            in_specs=[row_spec(D),
                      full_spec(w1b), full_spec(b1f),
                      full_spec(w2b), full_spec(b2f),
                      full_spec(w3p), full_spec(b3p),
                      full_spec(w4p), full_spec(b4p)],
            # Transposed, lane-dense output: sublane dim = out_sub (full dim),
            # lane dim = tile (multiple of 128) -> unmasked dense stores, tiny
            # HBM writeback.
            out_specs=pl.BlockSpec((out_sub, tile), lambda i: (0, i))),
        compiler_params=pltpu.CompilerParams(
            dimension_semantics=("parallel",),
            vmem_limit_bytes=vmem_limit),
        cost_estimate=cost,
    )(x, w1b, b1f, w2b, b2f, w3p, b3p, w4p, b4p)

    return out_t[:out_dim, :rows].T.reshape(B, N, out_dim)


def _reference_forward(concat_feature, params):
    """Pure-JAX f32 reference mirroring the PyTorch forward (for verification)."""
    B, N, D = concat_feature.shape
    h = concat_feature.reshape(B * N, D).astype(jnp.float32)
    for i, (w, b) in enumerate(params):
        h = h @ w + b
        if i < 3:
            h = jnp.maximum(h, 0.0)
    return h.reshape(B, N, -1).astype(concat_feature.dtype)


if __name__ == "__main__":
    key = jax.random.PRNGKey(0)
    k_param, k_x, k_x2 = jax.random.split(key, 3)

    B, N, input_dim, output_dim = 2, 16, 64, 3

    params = init_params(k_param, input_dim, output_dim)
    # PyTorch call site: concat_feature has shape (B, N, input_dim)
    concat_feature = jax.random.normal(k_x, (B, N, input_dim), jnp.float32)

    out = re_residual_net_forward(concat_feature, params)
    out = jax.block_until_ready(out)
    ref = _reference_forward(concat_feature, params)
    assert out.shape == (B, N, output_dim)
    # bf16 matmuls with f32 accumulation: compare against f32 ref with looser tol.
    assert jnp.allclose(out, ref, atol=2e-2, rtol=2e-2)

    # Second (still tiny) case exercising multiple row tiles / padding / the
    # auto-shrunk tile path (rows=1200 -> tile=256 -> grid of 5).
    B2, N2 = 3, 400
    x2 = jax.random.normal(k_x2, (B2, N2, input_dim), jnp.float32)
    out2 = jax.block_until_ready(re_residual_net_forward(x2, params))
    ref2 = _reference_forward(x2, params)
    assert out2.shape == (B2, N2, output_dim)
    assert jnp.allclose(out2, ref2, atol=2e-2, rtol=2e-2)

    print("KERNEL_OK")
</pallas_src>

<mosaic_0001>
module attributes {stable_mosaic.version = 11 : i64} {
  func.func @_mlp_kernel(%arg0: i32, %arg1: memref<256x64xf32, #tpu.memory_space<vmem>>, %arg2: memref<64x256xbf16, #tpu.memory_space<vmem>>, %arg3: memref<1x256xf32, #tpu.memory_space<vmem>>, %arg4: memref<256x256xbf16, #tpu.memory_space<vmem>>, %arg5: memref<1x256xf32, #tpu.memory_space<vmem>>, %arg6: memref<256x128xbf16, #tpu.memory_space<vmem>>, %arg7: memref<1x128xf32, #tpu.memory_space<vmem>>, %arg8: memref<128x128xbf16, #tpu.memory_space<vmem>>, %arg9: memref<1x128xf32, #tpu.memory_space<vmem>>, %arg10: memref<8x256xf32, #tpu.memory_space<vmem>>) attributes {dimension_semantics = [#tpu.dimension_semantics<parallel>], iteration_bounds = array<i64: 1>, scalar_prefetch = 0 : i64, scratch_operands = 0 : i64, tpu.core_type = #tpu.core_type<tc>, window_params = [{transform_indices = @transform_0, window_bounds = array<i64: 256, 64>}, {pipeline_mode = #tpu.pipeline_mode<synchronous>, transform_indices = @transform_1, window_bounds = array<i64: 64, 256>}, {pipeline_mode = #tpu.pipeline_mode<synchronous>, transform_indices = @transform_2, window_bounds = array<i64: 1, 256>}, {pipeline_mode = #tpu.pipeline_mode<synchronous>, transform_indices = @transform_3, window_bounds = array<i64: 256, 256>}, {pipeline_mode = #tpu.pipeline_mode<synchronous>, transform_indices = @transform_4, window_bounds = array<i64: 1, 256>}, {pipeline_mode = #tpu.pipeline_mode<synchronous>, transform_indices = @transform_5, window_bounds = array<i64: 256, 128>}, {pipeline_mode = #tpu.pipeline_mode<synchronous>, transform_indices = @transform_6, window_bounds = array<i64: 1, 128>}, {pipeline_mode = #tpu.pipeline_mode<synchronous>, transform_indices = @transform_7, window_bounds = array<i64: 128, 128>}, {pipeline_mode = #tpu.pipeline_mode<synchronous>, transform_indices = @transform_8, window_bounds = array<i64: 1, 128>}, {transform_indices = @transform_9, window_bounds = array<i64: 8, 256>}]} {
    %c0 = arith.constant 0 : index
    %c0_0 = arith.constant 0 : index
    %0 = vector.load %arg3[%c0, %c0_0] : memref<1x256xf32, #tpu.memory_space<vmem>>, vector<1x256xf32>
    %c0_1 = arith.constant 0 : index
    %c0_2 = arith.constant 0 : index
    %1 = vector.load %arg5[%c0_1, %c0_2] : memref<1x256xf32, #tpu.memory_space<vmem>>, vector<1x256xf32>
    %c0_3 = arith.constant 0 : index
    %c0_4 = arith.constant 0 : index
    %2 = vector.load %arg7[%c0_3, %c0_4] : memref<1x128xf32, #tpu.memory_space<vmem>>, vector<1x128xf32>
    %c0_5 = arith.constant 0 : index
    %c0_6 = arith.constant 0 : index
    %3 = vector.load %arg9[%c0_5, %c0_6] : memref<1x128xf32, #tpu.memory_space<vmem>>, vector<1x128xf32>
    %c0_7 = arith.constant 0 : index
    %c0_8 = arith.constant 0 : index
    %4 = vector.load %arg1[%c0_7, %c0_8] : memref<256x64xf32, #tpu.memory_space<vmem>>, vector<256x64xf32>
    %5 = arith.truncf %4 : vector<256x64xf32> to vector<256x64xbf16>
    %c0_9 = arith.constant 0 : index
    %c0_10 = arith.constant 0 : index
    %6 = vector.load %arg2[%c0_9, %c0_10] : memref<64x256xbf16, #tpu.memory_space<vmem>>, vector<64x256xbf16>
    %cst = arith.constant dense<0.000000e+00> : vector<256x256xf32>
    %7 = tpu.matmul %5, %6, %cst {dimension_numbers = #tpu.dot_dimension_numbers<[1], [0], [0], [1], [0, 0, 1, 1], [], []>} : vector<256x64xbf16>, vector<64x256xbf16>, vector<256x256xf32> -> vector<256x256xf32>
    %8 = vector.broadcast %0 : vector<1x256xf32> to vector<256x256xf32>
    %9 = arith.addf %7, %8 : vector<256x256xf32>
    %cst_11 = arith.constant 0.000000e+00 : f32
    %10 = vector.broadcast %cst_11 : f32 to vector<256x256xf32>
    %11 = arith.maximumf %9, %10 : vector<256x256xf32>
    %12 = arith.truncf %11 : vector<256x256xf32> to vector<256x256xbf16>
    %c0_12 = arith.constant 0 : index
    %c0_13 = arith.constant 0 : index
    %13 = vector.load %arg4[%c0_12, %c0_13] : memref<256x256xbf16, #tpu.memory_space<vmem>>, vector<256x256xbf16>
    %cst_14 = arith.constant dense<0.000000e+00> : vector<256x256xf32>
    %14 = tpu.matmul %12, %13, %cst_14 {dimension_numbers = #tpu.dot_dimension_numbers<[1], [0], [0], [1], [0, 0, 1, 1], [], []>} : vector<256x256xbf16>, vector<256x256xbf16>, vector<256x256xf32> -> vector<256x256xf32>
    %15 = vector.broadcast %1 : vector<1x256xf32> to vector<256x256xf32>
    %16 = arith.addf %14, %15 : vector<256x256xf32>
    %cst_15 = arith.constant 0.000000e+00 : f32
    %17 = vector.broadcast %cst_15 : f32 to vector<256x256xf32>
    %18 = arith.maximumf %16, %17 : vector<256x256xf32>
    %19 = arith.truncf %18 : vector<256x256xf32> to vector<256x256xbf16>
    %c0_16 = arith.constant 0 : index
    %c0_17 = arith.constant 0 : index
    %20 = vector.load %arg6[%c0_16, %c0_17] : memref<256x128xbf16, #tpu.memory_space<vmem>>, vector<256x128xbf16>
    %cst_18 = arith.constant dense<0.000000e+00> : vector<256x128xf32>
    %21 = tpu.matmul %19, %20, %cst_18 {dimension_numbers = #tpu.dot_dimension_numbers<[1], [0], [0], [1], [0, 0, 1, 1], [], []>} : vector<256x256xbf16>, vector<256x128xbf16>, vector<256x128xf32> -> vector<256x128xf32>
    %22 = vector.broadcast %2 : vector<1x128xf32> to vector<256x128xf32>
    %23 = arith.addf %21, %22 : vector<256x128xf32>
    %cst_19 = arith.constant 0.000000e+00 : f32
    %24 = vector.broadcast %cst_19 : f32 to vector<256x128xf32>
    %25 = arith.maximumf %23, %24 : vector<256x128xf32>
    %26 = arith.truncf %25 : vector<256x128xf32> to vector<256x128xbf16>
    %c0_20 = arith.constant 0 : index
    %c0_21 = arith.constant 0 : index
    %27 = vector.load %arg8[%c0_20, %c0_21] : memref<128x128xbf16, #tpu.memory_space<vmem>>, vector<128x128xbf16>
    %cst_22 = arith.constant dense<0.000000e+00> : vector<256x128xf32>
    %28 = tpu.matmul %26, %27, %cst_22 {dimension_numbers = #tpu.dot_dimension_numbers<[1], [0], [0], [1], [0, 0, 1, 1], [], []>} : vector<256x128xbf16>, vector<128x128xbf16>, vector<256x128xf32> -> vector<256x128xf32>
    %29 = vector.broadcast %3 : vector<1x128xf32> to vector<256x128xf32>
    %30 = arith.addf %28, %29 : vector<256x128xf32>
    %31 = tpu.transpose %30, [1, 0] : vector<256x128xf32> -> vector<128x256xf32>
    %32 = vector.extract_strided_slice %31 {offsets = [0, 0], sizes = [8, 256], strides = [1, 1]} : vector<128x256xf32> to vector<8x256xf32>
    %c0_23 = arith.constant 0 : index
    %c0_24 = arith.constant 0 : index
    %33 = vector.load %arg10[%c0_23, %c0_24] : memref<8x256xf32, #tpu.memory_space<vmem>>, vector<8x256xf32>
    tpu.vector_store %arg10[%c0_23, %c0_24], %32 {strides = array<i32>} : memref<8x256xf32, #tpu.memory_space<vmem>>, vector<8x256xf32>,
    return
  }
  func.func @transform_0(%arg0: i32) -> (i32, i32) {
    %c0_i32 = arith.constant 0 : i32
    %c0_i32_0 = arith.constant 0 : i32
    return %arg0, %c0_i32 : i32, i32
  }
  func.func @transform_1(%arg0: i32) -> (i32, i32) {
    %c0_i32 = arith.constant 0 : i32
    %c0_i32_0 = arith.constant 0 : i32
    %c0_i32_1 = arith.constant 0 : i32
    return %c0_i32, %c0_i32_0 : i32, i32
  }
  func.func @transform_2(%arg0: i32) -> (i32, i32) {
    %c0_i32 = arith.constant 0 : i32
    %c0_i32_0 = arith.constant 0 : i32
    %c0_i32_1 = arith.constant 0 : i32
    return %c0_i32, %c0_i32_0 : i32, i32
  }
  func.func @transform_3(%arg0: i32) -> (i32, i32) {
    %c0_i32 = arith.constant 0 : i32
    %c0_i32_0 = arith.constant 0 : i32
    %c0_i32_1 = arith.constant 0 : i32
    return %c0_i32, %c0_i32_0 : i32, i32
  }
  func.func @transform_4(%arg0: i32) -> (i32, i32) {
    %c0_i32 = arith.constant 0 : i32
    %c0_i32_0 = arith.constant 0 : i32
    %c0_i32_1 = arith.constant 0 : i32
    return %c0_i32, %c0_i32_0 : i32, i32
  }
  func.func @transform_5(%arg0: i32) -> (i32, i32) {
    %c0_i32 = arith.constant 0 : i32
    %c0_i32_0 = arith.constant 0 : i32
    %c0_i32_1 = arith.constant 0 : i32
    return %c0_i32, %c0_i32_0 : i32, i32
  }
  func.func @transform_6(%arg0: i32) -> (i32, i32) {
    %c0_i32 = arith.constant 0 : i32
    %c0_i32_0 = arith.constant 0 : i32
    %c0_i32_1 = arith.constant 0 : i32
    return %c0_i32, %c0_i32_0 : i32, i32
  }
  func.func @transform_7(%arg0: i32) -> (i32, i32) {
    %c0_i32 = arith.constant 0 : i32
    %c0_i32_0 = arith.constant 0 : i32
    %c0_i32_1 = arith.constant 0 : i32
    return %c0_i32, %c0_i32_0 : i32, i32
  }
  func.func @transform_8(%arg0: i32) -> (i32, i32) {
    %c0_i32 = arith.constant 0 : i32
    %c0_i32_0 = arith.constant 0 : i32
    %c0_i32_1 = arith.constant 0 : i32
    return %c0_i32, %c0_i32_0 : i32, i32
  }
  func.func @transform_9(%arg0: i32) -> (i32, i32) {
    %c0_i32 = arith.constant 0 : i32
    %c0_i32_0 = arith.constant 0 : i32
    return %c0_i32, %arg0 : i32, i32
  }
}

</mosaic_0001>

<llo_original>
// kernel: tpu_custom_call.1
$region0: #{tpu_custom_call.1}
  #allocation0 [shape = 'u32[]', space=smem, size = 0x4, offset = 0x4, fixed_abs, tag = 'smem constant byte address 0x4 - core index']
  #allocation1 [shape = 'u32[144,128]{1,0:T(1,128)}', space=vmem, size = 0x12000, scoped, tag = 'internal scratch']
  %s0 = inlined_call_operand.vmem [shape: f32[256,64], index: 0, kind: input, shape index: {}]
  %s1 = inlined_call_operand.hbm [shape: bf16[64,256], index: 1, kind: input, shape index: {}]
  %s2 = inlined_call_operand.vmem [shape: f32[1,256], index: 2, kind: input, shape index: {}]
  %s3 = inlined_call_operand.vmem [shape: bf16[256,256], index: 3, kind: input, shape index: {}]
  %s4 = inlined_call_operand.vmem [shape: f32[1,256], index: 4, kind: input, shape index: {}]
  %s5 = inlined_call_operand.vmem [shape: bf16[256,128], index: 5, kind: input, shape index: {}]
  %s6 = inlined_call_operand.vmem [shape: f32[1,128], index: 6, kind: input, shape index: {}]
  %s7 = inlined_call_operand.hbm [shape: bf16[128,128], index: 7, kind: input, shape index: {}]
  %s8 = inlined_call_operand.vmem [shape: f32[1,128], index: 8, kind: input, shape index: {}]
  %s9 = inlined_call_operand.hbm [shape: f32[8,256], index: 9, kind: output, shape index: {}]
  %s10 = sld [smem:[#allocation0]]
  $region54: #{tpu_custom_call.1} parent=0
    _
  %s12 = ssub.s32 1, %s10
  %s13 = scalar_select 0, %s12, %s10
  $region1: #{tpu_custom_call.1} parent=0
    #allocation2 [shape = 'u8[32768]{0}', space=vmem, size = 0x8000, scoped, tag = 'input window, operand 1, single buffered']
    #allocation3 [shape = 's32[1]{0}', space=sflag, size = 0x4, scoped, tag = 'scoped memory for tpu_custom_call.1']
    #allocation4 [shape = 's32[1]{0}', space=sflag, size = 0x4, scoped, tag = 'scoped memory for tpu_custom_call.1']
    #allocation5 [shape = 'u8[32768]{0}', space=vmem, size = 0x8000, scoped, tag = 'input window, operand 7, single buffered']
    #allocation6 [shape = 's32[1]{0}', space=sflag, size = 0x4, scoped, tag = 'scoped memory for tpu_custom_call.1']
    #allocation7 [shape = 'u8[8192]{0}', space=vmem, size = 0x2000, scoped, tag = 'output window, operand 0, single buffered']
    %14 = vsyncpa [#allocation3], 0
    %15 = vsyncpa [#allocation6], 0
    %16 = vsyncpa [#allocation4], 0
    // Predicated region
    $region2: #{tpu_custom_call.1} parent=1 // pred_check
      _
    $region3: #{tpu_custom_call.1} parent=1 // pred_check_branch
      %18 = sbr.rel (0) target = $region5
    $region4: #{tpu_custom_call.1} parent=1 // pred_region
      _
    $region5: #{tpu_custom_call.1} parent=1 // pred_fallthru
      _
    // Predicated region
    $region6: #{tpu_custom_call.1} parent=1 // pred_check
      _
    $region7: #{tpu_custom_call.1} parent=1 // pred_check_branch
      %20 = sbr.rel (0) target = $region9
    $region8: #{tpu_custom_call.1} parent=1 // pred_region
      %s22 = ssub.s32 1024, 1024
      %23 = vsyncadd [#allocation3], %s22
      %s24 = sshll.u32 [#allocation2], 4
      %s25 = int_to_ptr.vmem [resolvable:$true] %s24
      %30 = dma.hbm_to_vmem [thread:$0]  %s1, 1024, %s25, [#allocation3], 128, 128, 8
    $region9: #{tpu_custom_call.1} parent=1 // pred_fallthru
      _
    // Predicated region
    $region10: #{tpu_custom_call.1} parent=1 // pred_check
      _
    $region11: #{tpu_custom_call.1} parent=1 // pred_check_branch
      %32 = sbr.rel (0) target = $region13
    $region12: #{tpu_custom_call.1} parent=1 // pred_region
      _
    $region13: #{tpu_custom_call.1} parent=1 // pred_fallthru
      _
    // Predicated region
    $region14: #{tpu_custom_call.1} parent=1 // pred_check
      _
    $region15: #{tpu_custom_call.1} parent=1 // pred_check_branch
      %34 = sbr.rel (0) target = $region17
    $region16: #{tpu_custom_call.1} parent=1 // pred_region
      _
    $region17: #{tpu_custom_call.1} parent=1 // pred_fallthru
      _
    // Predicated region
    $region18: #{tpu_custom_call.1} parent=1 // pred_check
      _
    $region19: #{tpu_custom_call.1} parent=1 // pred_check_branch
      %36 = sbr.rel (0) target = $region21
    $region20: #{tpu_custom_call.1} parent=1 // pred_region
      _
    $region21: #{tpu_custom_call.1} parent=1 // pred_fallthru
      _
    // Predicated region
    $region22: #{tpu_custom_call.1} parent=1 // pred_check
      _
    $region23: #{tpu_custom_call.1} parent=1 // pred_check_branch
      %38 = sbr.rel (0) target = $region25
    $region24: #{tpu_custom_call.1} parent=1 // pred_region
      _
    $region25: #{tpu_custom_call.1} parent=1 // pred_fallthru
      _
    // Predicated region
    $region26: #{tpu_custom_call.1} parent=1 // pred_check
      _
    $region27: #{tpu_custom_call.1} parent=1 // pred_check_branch
      %40 = sbr.rel (0) target = $region29
    $region28: #{tpu_custom_call.1} parent=1 // pred_region
      _
    $region29: #{tpu_custom_call.1} parent=1 // pred_fallthru
      _
    // Predicated region
    $region30: #{tpu_custom_call.1} parent=1 // pred_check
      _
    $region31: #{tpu_custom_call.1} parent=1 // pred_check_branch
      %42 = sbr.rel (0) target = $region33
    $region32: #{tpu_custom_call.1} parent=1 // pred_region
      %s44 = ssub.s32 1024, 1024
      %45 = vsyncadd [#allocation6], %s44
      %s46 = sshll.u32 [#allocation5], 4
      %s47 = int_to_ptr.vmem [resolvable:$true] %s46
      %52 = dma.hbm_to_vmem [thread:$0]  %s7, 1024, %s47, [#allocation6], 64, 64, 4
    $region33: #{tpu_custom_call.1} parent=1 // pred_fallthru
      _
    // Predicated region
    $region34: #{tpu_custom_call.1} parent=1 // pred_check
      _
    $region35: #{tpu_custom_call.1} parent=1 // pred_check_branch
      %54 = sbr.rel (0) target = $region37
    $region36: #{tpu_custom_call.1} parent=1 // pred_region
      _
    $region37: #{tpu_custom_call.1} parent=1 // pred_fallthru
      _
    // Predicated region
    $region38: #{tpu_custom_call.1} parent=1 // pred_check
      _
    $region39: #{tpu_custom_call.1} parent=1 // pred_check_branch
      %56 = sbr.rel (0) target = $region41
    $region40: #{tpu_custom_call.1} parent=1 // pred_region
      %57 = dma.done [#allocation3], 1024
    $region41: #{tpu_custom_call.1} parent=1 // pred_fallthru
      _
    // Predicated region
    $region42: #{tpu_custom_call.1} parent=1 // pred_check
      _
    $region43: #{tpu_custom_call.1} parent=1 // pred_check_branch
      %59 = sbr.rel (0) target = $region45
    $region44: #{tpu_custom_call.1} parent=1 // pred_region
      %60 = dma.done [#allocation6], 1024
    $region45: #{tpu_custom_call.1} parent=1 // pred_fallthru
      _
    %v62 = vld [vmem:[%s2] sm:$0x3]
    %v63 = vld [vmem:[%s4] sm:$0x3]
    %v64 = vld [vmem:[%s6] sm:$0x1]
    %v65 = vld [vmem:[%s8] sm:$0x1]
    %v66 = vld [vmem:[%s0] sm:$0xff]
    %v67 = vld [vmem:[%s0 + $0x8] sm:$0xff]
    %v68 = vld [vmem:[%s0 + $0x10] sm:$0xff]
    %v69 = vld [vmem:[%s0 + $0x18] sm:$0xff]
    %v70 = vld [vmem:[%s0 + $0x20] sm:$0xff]
    %v71 = vld [vmem:[%s0 + $0x28] sm:$0xff]
    %v72 = vld [vmem:[%s0 + $0x30] sm:$0xff]
    %v73 = vld [vmem:[%s0 + $0x38] sm:$0xff]
    %v74 = vld [vmem:[%s0 + $0x40] sm:$0xff]
    %v75 = vld [vmem:[%s0 + $0x48] sm:$0xff]
    %v76 = vld [vmem:[%s0 + $0x50] sm:$0xff]
    %v77 = vld [vmem:[%s0 + $0x58] sm:$0xff]
    %v78 = vld [vmem:[%s0 + $0x60] sm:$0xff]
    %v79 = vld [vmem:[%s0 + $0x68] sm:$0xff]
    %v80 = vld [vmem:[%s0 + $0x70] sm:$0xff]
    %v81 = vld [vmem:[%s0 + $0x78] sm:$0xff]
    %v82 = vld [vmem:[%s0 + $0x80] sm:$0xff]
    %v83 = vld [vmem:[%s0 + $0x88] sm:$0xff]
    %v84 = vld [vmem:[%s0 + $0x90] sm:$0xff]
    %v85 = vld [vmem:[%s0 + $0x98] sm:$0xff]
    %v86 = vld [vmem:[%s0 + $0xa0] sm:$0xff]
    %v87 = vld [vmem:[%s0 + $0xa8] sm:$0xff]
    %v88 = vld [vmem:[%s0 + $0xb0] sm:$0xff]
    %v89 = vld [vmem:[%s0 + $0xb8] sm:$0xff]
    %v90 = vld [vmem:[%s0 + $0xc0] sm:$0xff]
    %v91 = vld [vmem:[%s0 + $0xc8] sm:$0xff]
    %v92 = vld [vmem:[%s0 + $0xd0] sm:$0xff]
    %v93 = vld [vmem:[%s0 + $0xd8] sm:$0xff]
    %v94 = vld [vmem:[%s0 + $0xe0] sm:$0xff]
    %v95 = vld [vmem:[%s0 + $0xe8] sm:$0xff]
    %v96 = vld [vmem:[%s0 + $0xf0] sm:$0xff]
    %v97 = vld [vmem:[%s0 + $0xf8] sm:$0xff]
    %v98 = vpack.c.bf16 %v67, %v66
    %v99 = vpack.c.bf16 %v69, %v68
    %v100 = vpack.c.bf16 %v71, %v70
    %v101 = vpack.c.bf16 %v73, %v72
    %v102 = vpack.c.bf16 %v75, %v74
    %v103 = vpack.c.bf16 %v77, %v76
    %v104 = vpack.c.bf16 %v79, %v78
    %v105 = vpack.c.bf16 %v81, %v80
    %v106 = vpack.c.bf16 %v83, %v82
    %v107 = vpack.c.bf16 %v85, %v84
    %v108 = vpack.c.bf16 %v87, %v86
    %v109 = vpack.c.bf16 %v89, %v88
    %v110 = vpack.c.bf16 %v91, %v90
    %v111 = vpack.c.bf16 %v93, %v92
    %v112 = vpack.c.bf16 %v95, %v94
    %v113 = vpack.c.bf16 %v97, %v96
    %v114 = vld [vmem:[#allocation2] sm:$0xff]
    %v115 = vld [vmem:[#allocation2 + $0x8] sm:$0xff]
    %v116 = vld [vmem:[#allocation2 + $0x10] sm:$0xff]
    %v117 = vld [vmem:[#allocation2 + $0x18] sm:$0xff]
    %v118 = vld [vmem:[#allocation2 + $0x20] sm:$0xff]
    %v119 = vld [vmem:[#allocation2 + $0x28] sm:$0xff]
    %v120 = vld [vmem:[#allocation2 + $0x30] sm:$0xff]
    %v121 = vld [vmem:[#allocation2 + $0x38] sm:$0xff]
    %v123 = vlaneseq
    %v124 = vshrl.u32 %v123, 7
    %v125 = vsub.s32 0, %v124
    %v126 = vrot.slane %v62, %v125
    %v127 = vlaneseq
    %v128 = vshrl.u32 %v127, 7
    %v129 = vsub.s32 1, %v128
    %v130 = vrot.slane %v62, %v129
    %v141 = vunpack.c.l.b16 %v114
    %v142 = vunpack.c.h.b16 %v114
    %v143 = vunpack.c.l.b16 %v115
    %v144 = vunpack.c.h.b16 %v115
    %v145 = vunpack.c.l.b16 %v116
    %v146 = vunpack.c.h.b16 %v116
    %v147 = vunpack.c.l.b16 %v117
    %v148 = vunpack.c.h.b16 %v117
    %v149 = vunpack.c.l.b16 %v118
    %v150 = vunpack.c.h.b16 %v118
    %v151 = vunpack.c.l.b16 %v119
    %v152 = vunpack.c.h.b16 %v119
    %v153 = vunpack.c.l.b16 %v120
    %v154 = vunpack.c.h.b16 %v120
    %v155 = vunpack.c.l.b16 %v121
    %v156 = vunpack.c.h.b16 %v121
    %v157 = vpack.c.b16 %v143, %v141
    %v158 = vpack.c.b16 %v144, %v142
    %v159 = vpack.c.b16 %v147, %v145
    %v160 = vpack.c.b16 %v148, %v146
    %v161 = vpack.c.b16 %v151, %v149
    %v162 = vpack.c.b16 %v152, %v150
    %v163 = vpack.c.b16 %v155, %v153
    %v164 = vpack.c.b16 %v156, %v154
    %vm173 = vcmask 523264
    %v175 = vsel %vm173, %v98, 0
    %v178 = vsel %vm173, %v99, 0
    %v181 = vsel %vm173, %v100, 0
    %v184 = vsel %vm173, %v101, 0
    %v187 = vsel %vm173, %v102, 0
    %v190 = vsel %vm173, %v103, 0
    %v193 = vsel %vm173, %v104, 0
    %v196 = vsel %vm173, %v105, 0
    %v199 = vsel %vm173, %v106, 0
    %v202 = vsel %vm173, %v107, 0
    %v205 = vsel %vm173, %v108, 0
    %v208 = vsel %vm173, %v109, 0
    %v211 = vsel %vm173, %v110, 0
    %v214 = vsel %vm173, %v111, 0
    %v217 = vsel %vm173, %v112, 0
    %v220 = vsel %vm173, %v113, 0
    %222 = vmatprep.subr.bf16.mxu0 %v158
    %223 = vmatpush1.bf16.msra.mxu0 %v157
    %224 = vmatprep.subr.bf16.mxu0 %v160
    %225 = vmatpush1.bf16.msra.mxu0 %v159
    %226 = vmatprep.subr.bf16.mxu0 %v162
    %227 = vmatpush1.bf16.msra.mxu0 %v161
    %228 = vmatprep.subr.bf16.mxu0 %v164
    %229 = vmatpush1.bf16.msra.mxu0 %v163
    %230 = vmatprep.subr.bf16.mxu0 0
    %231 = vmatpush1.bf16.msra.mxu0 0
    %232 = vmatprep.subr.bf16.mxu0 0
    %233 = vmatpush1.bf16.msra.mxu0 0
    %234 = vmatprep.subr.bf16.mxu0 0
    %235 = vmatpush1.bf16.msra.mxu0 0
    %236 = vmatprep.subr.bf16.mxu0 0
    %237 = vmatpush1.bf16.msra.mxu0 0
    %238 = vmatprep.subr.bf16.mxu0 0
    %239 = vmatpush1.bf16.msra.mxu0 0
    %240 = vmatprep.subr.bf16.mxu0 0
    %241 = vmatpush1.bf16.msra.mxu0 0
    %242 = vmatprep.subr.bf16.mxu0 0
    %243 = vmatpush1.bf16.msra.mxu0 0
    %244 = vmatprep.subr.bf16.mxu0 0
    %245 = vmatpush1.bf16.msra.mxu0 0
    %246 = vmatprep.subr.bf16.mxu0 0
    %247 = vmatpush1.bf16.msra.mxu0 0
    %248 = vmatprep.subr.bf16.mxu0 0
    %249 = vmatpush1.bf16.msra.mxu0 0
    %250 = vmatprep.subr.bf16.mxu0 0
    %251 = vmatpush1.bf16.msra.mxu0 0
    %252 = vmatprep.subr.bf16.mxu0 0
    %253 = vmatpush1.bf16.msra.mxu0 0
    %254 = vmatprep.mubr.bf16.mxu0 0
    %255 = vmatmul.mubr.bf16.gmra.mrb[0].mxu0 %v175
    %v256 = vpop.f32.mrb[0].mxu0
    %v257 = vadd.f32 %v126, %v256
    %v258 = vpop.f32.mrb[0].mxu0
    %v259 = vadd.f32 %v130, %v258
    %v260 = vpop.f32.mrb[0].mxu0
    %v261 = vadd.f32 %v126, %v260
    %v262 = vpop.f32.mrb[0].mxu0
    %v263 = vadd.f32 %v130, %v262
    %264 = vmatprep.mubr.bf16.mxu0 0
    %265 = vmatmul.mubr.bf16.gmra.mrb[0].mxu0 %v178
    %v266 = vpop.f32.mrb[0].mxu0
    %v267 = vadd.f32 %v126, %v266
    %v268 = vpop.f32.mrb[0].mxu0
    %v269 = vadd.f32 %v130, %v268
    %v270 = vpop.f32.mrb[0].mxu0
    %v271 = vadd.f32 %v126, %v270
    %v272 = vpop.f32.mrb[0].mxu0
    %v273 = vadd.f32 %v130, %v272
    %274 = vmatprep.mubr.bf16.mxu0 0
    %275 = vmatmul.mubr.bf16.gmra.mrb[0].mxu0 %v181
    %v276 = vpop.f32.mrb[0].mxu0
    %v277 = vadd.f32 %v126, %v276
    %v278 = vpop.f32.mrb[0].mxu0
    %v279 = vadd.f32 %v130, %v278
    %v280 = vpop.f32.mrb[0].mxu0
    %v281 = vadd.f32 %v126, %v280
    %v282 = vpop.f32.mrb[0].mxu0
    %v283 = vadd.f32 %v130, %v282
    %284 = vmatprep.mubr.bf16.mxu0 0
    %285 = vmatmul.mubr.bf16.gmra.mrb[0].mxu0 %v184
    %v286 = vpop.f32.mrb[0].mxu0
    %v287 = vadd.f32 %v126, %v286
    %v288 = vpop.f32.mrb[0].mxu0
    %v289 = vadd.f32 %v130, %v288
    %v290 = vpop.f32.mrb[0].mxu0
    %v291 = vadd.f32 %v126, %v290
    %v292 = vpop.f32.mrb[0].mxu0
    %v293 = vadd.f32 %v130, %v292
    %294 = vmatprep.mubr.bf16.mxu0 0
    %295 = vmatmul.mubr.bf16.gmra.mrb[0].mxu0 %v187
    %v296 = vpop.f32.mrb[0].mxu0
    %v297 = vadd.f32 %v126, %v296
    %v298 = vpop.f32.mrb[0].mxu0
    %v299 = vadd.f32 %v130, %v298
    %v300 = vpop.f32.mrb[0].mxu0
    %v301 = vadd.f32 %v126, %v300
    %v302 = vpop.f32.mrb[0].mxu0
    %v303 = vadd.f32 %v130, %v302
    %304 = vmatprep.mubr.bf16.mxu0 0
    %305 = vmatmul.mubr.bf16.gmra.mrb[0].mxu0 %v190
    %v306 = vpop.f32.mrb[0].mxu0
    %v307 = vadd.f32 %v126, %v306
    %v308 = vpop.f32.mrb[0].mxu0
    %v309 = vadd.f32 %v130, %v308
    %v310 = vpop.f32.mrb[0].mxu0
    %v311 = vadd.f32 %v126, %v310
    %v312 = vpop.f32.mrb[0].mxu0
    %v313 = vadd.f32 %v130, %v312
    %314 = vmatprep.mubr.bf16.mxu0 0
    %315 = vmatmul.mubr.bf16.gmra.mrb[0].mxu0 %v193
    %v316 = vpop.f32.mrb[0].mxu0
    %v317 = vadd.f32 %v126, %v316
    %v318 = vpop.f32.mrb[0].mxu0
    %v319 = vadd.f32 %v130, %v318
    %v320 = vpop.f32.mrb[0].mxu0
    %v321 = vadd.f32 %v126, %v320
    %v322 = vpop.f32.mrb[0].mxu0
    %v323 = vadd.f32 %v130, %v322
    %324 = vmatprep.mubr.bf16.mxu0 0
    %325 = vmatmul.mubr.bf16.gmra.mrb[0].mxu0 %v196
    %v326 = vpop.f32.mrb[0].mxu0
    %v327 = vadd.f32 %v126, %v326
    %v328 = vpop.f32.mrb[0].mxu0
    %v329 = vadd.f32 %v130, %v328
    %v330 = vpop.f32.mrb[0].mxu0
    %v331 = vadd.f32 %v126, %v330
    %v332 = vpop.f32.mrb[0].mxu0
    %v333 = vadd.f32 %v130, %v332
    %334 = vmatprep.mubr.bf16.mxu0 0
    %335 = vmatmul.mubr.bf16.gmra.mrb[0].mxu0 %v199
    %v336 = vpop.f32.mrb[0].mxu0
    %v337 = vadd.f32 %v126, %v336
    %v338 = vpop.f32.mrb[0].mxu0
    %v339 = vadd.f32 %v130, %v338
    %v340 = vpop.f32.mrb[0].mxu0
    %v341 = vadd.f32 %v126, %v340
    %v342 = vpop.f32.mrb[0].mxu0
    %v343 = vadd.f32 %v130, %v342
    %344 = vmatprep.mubr.bf16.mxu0 0
    %345 = vmatmul.mubr.bf16.gmra.mrb[0].mxu0 %v202
    %v346 = vpop.f32.mrb[0].mxu0
    %v347 = vadd.f32 %v126, %v346
    %v348 = vpop.f32.mrb[0].mxu0
    %v349 = vadd.f32 %v130, %v348
    %v350 = vpop.f32.mrb[0].mxu0
    %v351 = vadd.f32 %v126, %v350
    %v352 = vpop.f32.mrb[0].mxu0
    %v353 = vadd.f32 %v130, %v352
    %354 = vmatprep.mubr.bf16.mxu0 0
    %355 = vmatmul.mubr.bf16.gmra.mrb[0].mxu0 %v205
    %v356 = vpop.f32.mrb[0].mxu0
    %v357 = vadd.f32 %v126, %v356
    %v358 = vpop.f32.mrb[0].mxu0
    %v359 = vadd.f32 %v130, %v358
    %v360 = vpop.f32.mrb[0].mxu0
    %v361 = vadd.f32 %v126, %v360
    %v362 = vpop.f32.mrb[0].mxu0
    %v363 = vadd.f32 %v130, %v362
    %364 = vmatprep.mubr.bf16.mxu0 0
    %365 = vmatmul.mubr.bf16.gmra.mrb[0].mxu0 %v208
    %v366 = vpop.f32.mrb[0].mxu0
    %v367 = vadd.f32 %v126, %v366
    %v368 = vpop.f32.mrb[0].mxu0
    %v369 = vadd.f32 %v130, %v368
    %v370 = vpop.f32.mrb[0].mxu0
    %v371 = vadd.f32 %v126, %v370
    %v372 = vpop.f32.mrb[0].mxu0
    %v373 = vadd.f32 %v130, %v372
    %374 = vmatprep.mubr.bf16.mxu0 0
    %375 = vmatmul.mubr.bf16.gmra.mrb[0].mxu0 %v211
    %v376 = vpop.f32.mrb[0].mxu0
    %v377 = vadd.f32 %v126, %v376
    %v378 = vpop.f32.mrb[0].mxu0
    %v379 = vadd.f32 %v130, %v378
    %v380 = vpop.f32.mrb[0].mxu0
    %v381 = vadd.f32 %v126, %v380
    %v382 = vpop.f32.mrb[0].mxu0
    %v383 = vadd.f32 %v130, %v382
    %384 = vmatprep.mubr.bf16.mxu0 0
    %385 = vmatmul.mubr.bf16.gmra.mrb[0].mxu0 %v214
    %v386 = vpop.f32.mrb[0].mxu0
    %v387 = vadd.f32 %v126, %v386
    %v388 = vpop.f32.mrb[0].mxu0
    %v389 = vadd.f32 %v130, %v388
    %v390 = vpop.f32.mrb[0].mxu0
    %v391 = vadd.f32 %v126, %v390
    %v392 = vpop.f32.mrb[0].mxu0
    %v393 = vadd.f32 %v130, %v392
    %394 = vmatprep.mubr.bf16.mxu0 0
    %395 = vmatmul.mubr.bf16.gmra.mrb[0].mxu0 %v217
    %v396 = vpop.f32.mrb[0].mxu0
    %v397 = vadd.f32 %v126, %v396
    %v398 = vpop.f32.mrb[0].mxu0
    %v399 = vadd.f32 %v130, %v398
    %v400 = vpop.f32.mrb[0].mxu0
    %v401 = vadd.f32 %v126, %v400
    %v402 = vpop.f32.mrb[0].mxu0
    %v403 = vadd.f32 %v130, %v402
    %404 = vmatprep.mubr.bf16.mxu0 0
    %405 = vmatmul.mubr.bf16.gmra.mrb[0].mxu0 %v220
    %v406 = vpop.f32.mrb[0].mxu0
    %v407 = vadd.f32 %v126, %v406
    %v408 = vpop.f32.mrb[0].mxu0
    %v409 = vadd.f32 %v130, %v408
    %v410 = vpop.f32.mrb[0].mxu0
    %v411 = vadd.f32 %v126, %v410
    %v412 = vpop.f32.mrb[0].mxu0
    %v413 = vadd.f32 %v130, %v412
    %414 = vdwg.mxu0
    %v415 = vmax.f32 %v257, 0.0
    %v416 = vmax.f32 %v259, 0.0
    %v417 = vmax.f32 %v261, 0.0
    %v418 = vmax.f32 %v263, 0.0
    %v419 = vmax.f32 %v267, 0.0
    %v420 = vmax.f32 %v269, 0.0
    %v421 = vmax.f32 %v271, 0.0
    %v422 = vmax.f32 %v273, 0.0
    %v423 = vmax.f32 %v277, 0.0
    %v424 = vmax.f32 %v279, 0.0
    %v425 = vmax.f32 %v281, 0.0
    %v426 = vmax.f32 %v283, 0.0
    %v427 = vmax.f32 %v287, 0.0
    %v428 = vmax.f32 %v289, 0.0
    %v429 = vmax.f32 %v291, 0.0
    %v430 = vmax.f32 %v293, 0.0
    %v431 = vmax.f32 %v297, 0.0
    %v432 = vmax.f32 %v299, 0.0
    %v433 = vmax.f32 %v301, 0.0
    %v434 = vmax.f32 %v303, 0.0
    %v435 = vmax.f32 %v307, 0.0
    %v436 = vmax.f32 %v309, 0.0
    %v437 = vmax.f32 %v311, 0.0
    %v438 = vmax.f32 %v313, 0.0
    %v439 = vmax.f32 %v317, 0.0
    %v440 = vmax.f32 %v319, 0.0
    %v441 = vmax.f32 %v321, 0.0
    %v442 = vmax.f32 %v323, 0.0
    %v443 = vmax.f32 %v327, 0.0
    %v444 = vmax.f32 %v329, 0.0
    %v445 = vmax.f32 %v331, 0.0
    %v446 = vmax.f32 %v333, 0.0
    %v447 = vmax.f32 %v337, 0.0
    %v448 = vmax.f32 %v339, 0.0
    %v449 = vmax.f32 %v341, 0.0
    %v450 = vmax.f32 %v343, 0.0
    %v451 = vmax.f32 %v347, 0.0
    %v452 = vmax.f32 %v349, 0.0
    %v453 = vmax.f32 %v351, 0.0
    %v454 = vmax.f32 %v353, 0.0
    %v455 = vmax.f32 %v357, 0.0
    %v456 = vmax.f32 %v359, 0.0
    %v457 = vmax.f32 %v361, 0.0
    %v458 = vmax.f32 %v363, 0.0
    %v459 = vmax.f32 %v367, 0.0
    %v460 = vmax.f32 %v369, 0.0
    %v461 = vmax.f32 %v371, 0.0
    %v462 = vmax.f32 %v373, 0.0
    %v463 = vmax.f32 %v377, 0.0
    %v464 = vmax.f32 %v379, 0.0
    %v465 = vmax.f32 %v381, 0.0
    %v466 = vmax.f32 %v383, 0.0
    %v467 = vmax.f32 %v387, 0.0
    %v468 = vmax.f32 %v389, 0.0
    %v469 = vmax.f32 %v391, 0.0
    %v470 = vmax.f32 %v393, 0.0
    %v471 = vmax.f32 %v397, 0.0
    %v472 = vmax.f32 %v399, 0.0
    %v473 = vmax.f32 %v401, 0.0
    %v474 = vmax.f32 %v403, 0.0
    %v475 = vmax.f32 %v407, 0.0
    %v476 = vmax.f32 %v409, 0.0
    %v477 = vmax.f32 %v411, 0.0
    %v478 = vmax.f32 %v413, 0.0
    %v479 = vpack.c.bf16 %v417, %v415
    %v480 = vpack.c.bf16 %v418, %v416
    %v481 = vpack.c.bf16 %v421, %v419
    %v482 = vpack.c.bf16 %v422, %v420
    %v483 = vpack.c.bf16 %v425, %v423
    %v484 = vpack.c.bf16 %v426, %v424
    %v485 = vpack.c.bf16 %v429, %v427
    %v486 = vpack.c.bf16 %v430, %v428
    %v487 = vpack.c.bf16 %v433, %v431
    %v488 = vpack.c.bf16 %v434, %v432
    %v489 = vpack.c.bf16 %v437, %v435
    %v490 = vpack.c.bf16 %v438, %v436
    %v491 = vpack.c.bf16 %v441, %v439
    %v492 = vpack.c.bf16 %v442, %v440
    %v493 = vpack.c.bf16 %v445, %v443
    %v494 = vpack.c.bf16 %v446, %v444
    %v495 = vpack.c.bf16 %v449, %v447
    %v496 = vpack.c.bf16 %v450, %v448
    %v497 = vpack.c.bf16 %v453, %v451
    %v498 = vpack.c.bf16 %v454, %v452
    %v499 = vpack.c.bf16 %v457, %v455
    %v500 = vpack.c.bf16 %v458, %v456
    %v501 = vpack.c.bf16 %v461, %v459
    %v502 = vpack.c.bf16 %v462, %v460
    %v503 = vpack.c.bf16 %v465, %v463
    %v504 = vpack.c.bf16 %v466, %v464
    %v505 = vpack.c.bf16 %v469, %v467
    %v506 = vpack.c.bf16 %v470, %v468
    %v507 = vpack.c.bf16 %v473, %v471
    %v508 = vpack.c.bf16 %v474, %v472
    %v509 = vpack.c.bf16 %v477, %v475
    %v510 = vpack.c.bf16 %v478, %v476
    %v511 = vld [vmem:[%s3] sm:$0xff]
    %v512 = vld [vmem:[%s3 + $0x8] sm:$0xff]
    %v513 = vld [vmem:[%s3 + $0x10] sm:$0xff]
    %v514 = vld [vmem:[%s3 + $0x18] sm:$0xff]
    %v515 = vld [vmem:[%s3 + $0x20] sm:$0xff]
    %v516 = vld [vmem:[%s3 + $0x28] sm:$0xff]
    %v517 = vld [vmem:[%s3 + $0x30] sm:$0xff]
    %v518 = vld [vmem:[%s3 + $0x38] sm:$0xff]
    %v519 = vld [vmem:[%s3 + $0x40] sm:$0xff]
    %v520 = vld [vmem:[%s3 + $0x48] sm:$0xff]
    %v521 = vld [vmem:[%s3 + $0x50] sm:$0xff]
    %v522 = vld [vmem:[%s3 + $0x58] sm:$0xff]
    %v523 = vld [vmem:[%s3 + $0x60] sm:$0xff]
    %v524 = vld [vmem:[%s3 + $0x68] sm:$0xff]
    %v525 = vld [vmem:[%s3 + $0x70] sm:$0xff]
    %v526 = vld [vmem:[%s3 + $0x78] sm:$0xff]
    %v527 = vld [vmem:[%s3 + $0x80] sm:$0xff]
    %v528 = vld [vmem:[%s3 + $0x88] sm:$0xff]
    %v529 = vld [vmem:[%s3 + $0x90] sm:$0xff]
    %v530 = vld [vmem:[%s3 + $0x98] sm:$0xff]
    %v531 = vld [vmem:[%s3 + $0xa0] sm:$0xff]
    %v532 = vld [vmem:[%s3 + $0xa8] sm:$0xff]
    %v533 = vld [vmem:[%s3 + $0xb0] sm:$0xff]
    %v534 = vld [vmem:[%s3 + $0xb8] sm:$0xff]
    %v535 = vld [vmem:[%s3 + $0xc0] sm:$0xff]
    %v536 = vld [vmem:[%s3 + $0xc8] sm:$0xff]
    %v537 = vld [vmem:[%s3 + $0xd0] sm:$0xff]
    %v538 = vld [vmem:[%s3 + $0xd8] sm:$0xff]
    %v539 = vld [vmem:[%s3 + $0xe0] sm:$0xff]
    %v540 = vld [vmem:[%s3 + $0xe8] sm:$0xff]
    %v541 = vld [vmem:[%s3 + $0xf0] sm:$0xff]
    %v542 = vld [vmem:[%s3 + $0xf8] sm:$0xff]
    %v544 = vlaneseq
    %v545 = vshrl.u32 %v544, 7
    %v546 = vsub.s32 0, %v545
    %v547 = vrot.slane %v63, %v546
    %v548 = vlaneseq
    %v549 = vshrl.u32 %v548, 7
    %v550 = vsub.s32 1, %v549
    %v551 = vrot.slane %v63, %v550
    %v586 = vunpack.c.l.b16 %v511
    %v587 = vunpack.c.h.b16 %v511
    %v588 = vunpack.c.l.b16 %v512
    %v589 = vunpack.c.h.b16 %v512
    %v590 = vunpack.c.l.b16 %v513
    %v591 = vunpack.c.h.b16 %v513
    %v592 = vunpack.c.l.b16 %v514
    %v593 = vunpack.c.h.b16 %v514
    %v594 = vunpack.c.l.b16 %v515
    %v595 = vunpack.c.h.b16 %v515
    %v596 = vunpack.c.l.b16 %v516
    %v597 = vunpack.c.h.b16 %v516
    %v598 = vunpack.c.l.b16 %v517
    %v599 = vunpack.c.h.b16 %v517
    %v600 = vunpack.c.l.b16 %v518
    %v601 = vunpack.c.h.b16 %v518
    %v602 = vunpack.c.l.b16 %v519
    %v603 = vunpack.c.h.b16 %v519
    %v604 = vunpack.c.l.b16 %v520
    %v605 = vunpack.c.h.b16 %v520
    %v606 = vunpack.c.l.b16 %v521
    %v607 = vunpack.c.h.b16 %v521
    %v608 = vunpack.c.l.b16 %v522
    %v609 = vunpack.c.h.b16 %v522
    %v610 = vunpack.c.l.b16 %v523
    %v611 = vunpack.c.h.b16 %v523
    %v612 = vunpack.c.l.b16 %v524
    %v613 = vunpack.c.h.b16 %v524
    %v614 = vunpack.c.l.b16 %v525
    %v615 = vunpack.c.h.b16 %v525
    %v616 = vunpack.c.l.b16 %v526
    %v617 = vunpack.c.h.b16 %v526
    %v618 = vunpack.c.l.b16 %v527
    %v619 = vunpack.c.h.b16 %v527
    %v620 = vunpack.c.l.b16 %v528
    %v621 = vunpack.c.h.b16 %v528
    %v622 = vunpack.c.l.b16 %v529
    %v623 = vunpack.c.h.b16 %v529
    %v624 = vunpack.c.l.b16 %v530
    %v625 = vunpack.c.h.b16 %v530
    %v626 = vunpack.c.l.b16 %v531
    %v627 = vunpack.c.h.b16 %v531
    %v628 = vunpack.c.l.b16 %v532
    %v629 = vunpack.c.h.b16 %v532
    %v630 = vunpack.c.l.b16 %v533
    %v631 = vunpack.c.h.b16 %v533
    %v632 = vunpack.c.l.b16 %v534
    %v633 = vunpack.c.h.b16 %v534
    %v634 = vunpack.c.l.b16 %v535
    %v635 = vunpack.c.h.b16 %v535
    %v636 = vunpack.c.l.b16 %v536
    %v637 = vunpack.c.h.b16 %v536
    %v638 = vunpack.c.l.b16 %v537
    %v639 = vunpack.c.h.b16 %v537
    %v640 = vunpack.c.l.b16 %v538
    %v641 = vunpack.c.h.b16 %v538
    %v642 = vunpack.c.l.b16 %v539
    %v643 = vunpack.c.h.b16 %v539
    %v644 = vunpack.c.l.b16 %v540
    %v645 = vunpack.c.h.b16 %v540
    %v646 = vunpack.c.l.b16 %v541
    %v647 = vunpack.c.h.b16 %v541
    %v648 = vunpack.c.l.b16 %v542
    %v649 = vunpack.c.h.b16 %v542
    %v650 = vpack.c.b16 %v588, %v586
    %v651 = vpack.c.b16 %v589, %v587
    %v652 = vpack.c.b16 %v592, %v590
    %v653 = vpack.c.b16 %v593, %v591
    %v654 = vpack.c.b16 %v596, %v594
    %v655 = vpack.c.b16 %v597, %v595
    %v656 = vpack.c.b16 %v600, %v598
    %v657 = vpack.c.b16 %v601, %v599
    %v658 = vpack.c.b16 %v604, %v602
    %v659 = vpack.c.b16 %v605, %v603
    %v660 = vpack.c.b16 %v608, %v606
    %v661 = vpack.c.b16 %v609, %v607
    %v662 = vpack.c.b16 %v612, %v610
    %v663 = vpack.c.b16 %v613, %v611
    %v664 = vpack.c.b16 %v616, %v614
    %v665 = vpack.c.b16 %v617, %v615
    %v666 = vpack.c.b16 %v620, %v618
    %v667 = vpack.c.b16 %v621, %v619
    %v668 = vpack.c.b16 %v624, %v622
    %v669 = vpack.c.b16 %v625, %v623
    %v670 = vpack.c.b16 %v628, %v626
    %v671 = vpack.c.b16 %v629, %v627
    %v672 = vpack.c.b16 %v632, %v630
    %v673 = vpack.c.b16 %v633, %v631
    %v674 = vpack.c.b16 %v636, %v634
    %v675 = vpack.c.b16 %v637, %v635
    %v676 = vpack.c.b16 %v640, %v638
    %v677 = vpack.c.b16 %v641, %v639
    %v678 = vpack.c.b16 %v644, %v642
    %v679 = vpack.c.b16 %v645, %v643
    %v680 = vpack.c.b16 %v648, %v646
    %v681 = vpack.c.b16 %v649, %v647
    %714 = vmatprep.subr.bf16.mxu0 %v651
    %715 = vmatpush1.bf16.msra.mxu0 %v650
    %716 = vmatprep.subr.bf16.mxu0 %v653
    %717 = vmatpush1.bf16.msra.mxu0 %v652
    %718 = vmatprep.subr.bf16.mxu0 %v655
    %719 = vmatpush1.bf16.msra.mxu0 %v654
    %720 = vmatprep.subr.bf16.mxu0 %v657
    %721 = vmatpush1.bf16.msra.mxu0 %v656
    %722 = vmatprep.subr.bf16.mxu0 %v659
    %723 = vmatpush1.bf16.msra.mxu0 %v658
    %724 = vmatprep.subr.bf16.mxu0 %v661
    %725 = vmatpush1.bf16.msra.mxu0 %v660
    %726 = vmatprep.subr.bf16.mxu0 %v663
    %727 = vmatpush1.bf16.msra.mxu0 %v662
    %728 = vmatprep.subr.bf16.mxu0 %v665
    %729 = vmatpush1.bf16.msra.mxu0 %v664
    %730 = vmatprep.subr.bf16.mxu0 %v667
    %731 = vmatpush1.bf16.msra.mxu0 %v666
    %732 = vmatprep.subr.bf16.mxu0 %v669
    %733 = vmatpush1.bf16.msra.mxu0 %v668
    %734 = vmatprep.subr.bf16.mxu0 %v671
    %735 = vmatpush1.bf16.msra.mxu0 %v670
    %736 = vmatprep.subr.bf16.mxu0 %v673
    %737 = vmatpush1.bf16.msra.mxu0 %v672
    %738 = vmatprep.subr.bf16.mxu0 %v675
    %739 = vmatpush1.bf16.msra.mxu0 %v674
    %740 = vmatprep.subr.bf16.mxu0 %v677
    %741 = vmatpush1.bf16.msra.mxu0 %v676
    %742 = vmatprep.subr.bf16.mxu0 %v679
    %743 = vmatpush1.bf16.msra.mxu0 %v678
    %744 = vmatprep.subr.bf16.mxu0 %v681
    %745 = vmatpush1.bf16.msra.mxu0 %v680
    %746 = vmatprep.mubr.bf16.mxu0 %v480
    %747 = vmatmul.mubr.bf16.gmra.mrb[0].mxu0 %v479
    %v748 = vpop.f32.mrb[0].mxu0
    %v749 = vadd.f32 %v547, %v748
    %v750 = vpop.f32.mrb[0].mxu0
    %v751 = vadd.f32 %v551, %v750
    %v752 = vpop.f32.mrb[0].mxu0
    %v753 = vadd.f32 %v547, %v752
    %v754 = vpop.f32.mrb[0].mxu0
    %v755 = vadd.f32 %v551, %v754
    %756 = vmatprep.mubr.bf16.mxu0 %v482
    %757 = vmatmul.mubr.bf16.gmra.mrb[0].mxu0 %v481
    %v758 = vpop.f32.mrb[0].mxu0
    %v759 = vadd.f32 %v547, %v758
    %v760 = vpop.f32.mrb[0].mxu0
    %v761 = vadd.f32 %v551, %v760
    %v762 = vpop.f32.mrb[0].mxu0
    %v763 = vadd.f32 %v547, %v762
    %v764 = vpop.f32.mrb[0].mxu0
    %v765 = vadd.f32 %v551, %v764
    %766 = vmatprep.mubr.bf16.mxu0 %v484
    %767 = vmatmul.mubr.bf16.gmra.mrb[0].mxu0 %v483
    %v768 = vpop.f32.mrb[0].mxu0
    %v769 = vadd.f32 %v547, %v768
    %v770 = vpop.f32.mrb[0].mxu0
    %v771 = vadd.f32 %v551, %v770
    %v772 = vpop.f32.mrb[0].mxu0
    %v773 = vadd.f32 %v547, %v772
    %v774 = vpop.f32.mrb[0].mxu0
    %v775 = vadd.f32 %v551, %v774
    %776 = vmatprep.mubr.bf16.mxu0 %v486
    %777 = vmatmul.mubr.bf16.gmra.mrb[0].mxu0 %v485
    %v778 = vpop.f32.mrb[0].mxu0
    %v779 = vadd.f32 %v547, %v778
    %v780 = vpop.f32.mrb[0].mxu0
    %v781 = vadd.f32 %v551, %v780
    %v782 = vpop.f32.mrb[0].mxu0
    %v783 = vadd.f32 %v547, %v782
    %v784 = vpop.f32.mrb[0].mxu0
    %v785 = vadd.f32 %v551, %v784
    %786 = vmatprep.mubr.bf16.mxu0 %v488
    %787 = vmatmul.mubr.bf16.gmra.mrb[0].mxu0 %v487
    %v788 = vpop.f32.mrb[0].mxu0
    %v789 = vadd.f32 %v547, %v788
    %v790 = vpop.f32.mrb[0].mxu0
    %v791 = vadd.f32 %v551, %v790
    %v792 = vpop.f32.mrb[0].mxu0
    %v793 = vadd.f32 %v547, %v792
    %v794 = vpop.f32.mrb[0].mxu0
    %v795 = vadd.f32 %v551, %v794
    %796 = vmatprep.mubr.bf16.mxu0 %v490
    %797 = vmatmul.mubr.bf16.gmra.mrb[0].mxu0 %v489
    %v798 = vpop.f32.mrb[0].mxu0
    %v799 = vadd.f32 %v547, %v798
    %v800 = vpop.f32.mrb[0].mxu0
    %v801 = vadd.f32 %v551, %v800
    %v802 = vpop.f32.mrb[0].mxu0
    %v803 = vadd.f32 %v547, %v802
    %v804 = vpop.f32.mrb[0].mxu0
    %v805 = vadd.f32 %v551, %v804
    %806 = vmatprep.mubr.bf16.mxu0 %v492
    %807 = vmatmul.mubr.bf16.gmra.mrb[0].mxu0 %v491
    %v808 = vpop.f32.mrb[0].mxu0
    %v809 = vadd.f32 %v547, %v808
    %v810 = vpop.f32.mrb[0].mxu0
    %v811 = vadd.f32 %v551, %v810
    %v812 = vpop.f32.mrb[0].mxu0
    %v813 = vadd.f32 %v547, %v812
    %v814 = vpop.f32.mrb[0].mxu0
    %v815 = vadd.f32 %v551, %v814
    %816 = vmatprep.mubr.bf16.mxu0 %v494
    %817 = vmatmul.mubr.bf16.gmra.mrb[0].mxu0 %v493
    %v818 = vpop.f32.mrb[0].mxu0
    %v819 = vadd.f32 %v547, %v818
    %v820 = vpop.f32.mrb[0].mxu0
    %v821 = vadd.f32 %v551, %v820
    %v822 = vpop.f32.mrb[0].mxu0
    %v823 = vadd.f32 %v547, %v822
    %v824 = vpop.f32.mrb[0].mxu0
    %v825 = vadd.f32 %v551, %v824
    %826 = vmatprep.mubr.bf16.mxu0 %v496
    %827 = vmatmul.mubr.bf16.gmra.mrb[0].mxu0 %v495
    %v828 = vpop.f32.mrb[0].mxu0
    %v829 = vadd.f32 %v547, %v828
    %v830 = vpop.f32.mrb[0].mxu0
    %v831 = vadd.f32 %v551, %v830
    %v832 = vpop.f32.mrb[0].mxu0
    %v833 = vadd.f32 %v547, %v832
    %v834 = vpop.f32.mrb[0].mxu0
    %v835 = vadd.f32 %v551, %v834
    %836 = vmatprep.mubr.bf16.mxu0 %v498
    %837 = vmatmul.mubr.bf16.gmra.mrb[0].mxu0 %v497
    %v838 = vpop.f32.mrb[0].mxu0
    %v839 = vadd.f32 %v547, %v838
    %v840 = vpop.f32.mrb[0].mxu0
    %v841 = vadd.f32 %v551, %v840
    %v842 = vpop.f32.mrb[0].mxu0
    %v843 = vadd.f32 %v547, %v842
    %v844 = vpop.f32.mrb[0].mxu0
    %v845 = vadd.f32 %v551, %v844
    %846 = vmatprep.mubr.bf16.mxu0 %v500
    %847 = vmatmul.mubr.bf16.gmra.mrb[0].mxu0 %v499
    %v848 = vpop.f32.mrb[0].mxu0
    %v849 = vadd.f32 %v547, %v848
    %v850 = vpop.f32.mrb[0].mxu0
    %v851 = vadd.f32 %v551, %v850
    %v852 = vpop.f32.mrb[0].mxu0
    %v853 = vadd.f32 %v547, %v852
    %v854 = vpop.f32.mrb[0].mxu0
    %v855 = vadd.f32 %v551, %v854
    %856 = vmatprep.mubr.bf16.mxu0 %v502
    %857 = vmatmul.mubr.bf16.gmra.mrb[0].mxu0 %v501
    %v858 = vpop.f32.mrb[0].mxu0
    %v859 = vadd.f32 %v547, %v858
    %v860 = vpop.f32.mrb[0].mxu0
    %v861 = vadd.f32 %v551, %v860
    %v862 = vpop.f32.mrb[0].mxu0
    %v863 = vadd.f32 %v547, %v862
    %v864 = vpop.f32.mrb[0].mxu0
    %v865 = vadd.f32 %v551, %v864
    %866 = vmatprep.mubr.bf16.mxu0 %v504
    %867 = vmatmul.mubr.bf16.gmra.mrb[0].mxu0 %v503
    %v868 = vpop.f32.mrb[0].mxu0
    %v869 = vadd.f32 %v547, %v868
    %v870 = vpop.f32.mrb[0].mxu0
    %v871 = vadd.f32 %v551, %v870
    %v872 = vpop.f32.mrb[0].mxu0
    %v873 = vadd.f32 %v547, %v872
    %v874 = vpop.f32.mrb[0].mxu0
    %v875 = vadd.f32 %v551, %v874
    %876 = vmatprep.mubr.bf16.mxu0 %v506
    %877 = vmatmul.mubr.bf16.gmra.mrb[0].mxu0 %v505
    %v878 = vpop.f32.mrb[0].mxu0
    %v879 = vadd.f32 %v547, %v878
    %v880 = vpop.f32.mrb[0].mxu0
    %v881 = vadd.f32 %v551, %v880
    %v882 = vpop.f32.mrb[0].mxu0
    %v883 = vadd.f32 %v547, %v882
    %v884 = vpop.f32.mrb[0].mxu0
    %v885 = vadd.f32 %v551, %v884
    %886 = vmatprep.mubr.bf16.mxu0 %v508
    %887 = vmatmul.mubr.bf16.gmra.mrb[0].mxu0 %v507
    %v888 = vpop.f32.mrb[0].mxu0
    %v889 = vadd.f32 %v547, %v888
    %v890 = vpop.f32.mrb[0].mxu0
    %v891 = vadd.f32 %v551, %v890
    %v892 = vpop.f32.mrb[0].mxu0
    %v893 = vadd.f32 %v547, %v892
    %v894 = vpop.f32.mrb[0].mxu0
    %v895 = vadd.f32 %v551, %v894
    %896 = vmatprep.mubr.bf16.mxu0 %v510
    %897 = vmatmul.mubr.bf16.gmra.mrb[0].mxu0 %v509
    %v898 = vpop.f32.mrb[0].mxu0
    %v899 = vadd.f32 %v547, %v898
    %v900 = vpop.f32.mrb[0].mxu0
    %v901 = vadd.f32 %v551, %v900
    %v902 = vpop.f32.mrb[0].mxu0
    %v903 = vadd.f32 %v547, %v902
    %v904 = vpop.f32.mrb[0].mxu0
    %v905 = vadd.f32 %v551, %v904
    %906 = vdwg.mxu0
    %v907 = vmax.f32 %v749, 0.0
    %v908 = vmax.f32 %v751, 0.0
    %v909 = vmax.f32 %v753, 0.0
    %v910 = vmax.f32 %v755, 0.0
    %v911 = vmax.f32 %v759, 0.0
    %v912 = vmax.f32 %v761, 0.0
    %v913 = vmax.f32 %v763, 0.0
    %v914 = vmax.f32 %v765, 0.0
    %v915 = vmax.f32 %v769, 0.0
    %v916 = vmax.f32 %v771, 0.0
    %v917 = vmax.f32 %v773, 0.0
    %v918 = vmax.f32 %v775, 0.0
    %v919 = vmax.f32 %v779, 0.0
    %v920 = vmax.f32 %v781, 0.0
    %v921 = vmax.f32 %v783, 0.0
    %v922 = vmax.f32 %v785, 0.0
    %v923 = vmax.f32 %v789, 0.0
    %v924 = vmax.f32 %v791, 0.0
    %v925 = vmax.f32 %v793, 0.0
    %v926 = vmax.f32 %v795, 0.0
    %v927 = vmax.f32 %v799, 0.0
    %v928 = vmax.f32 %v801, 0.0
    %v929 = vmax.f32 %v803, 0.0
    %v930 = vmax.f32 %v805, 0.0
    %v931 = vmax.f32 %v809, 0.0
    %v932 = vmax.f32 %v811, 0.0
    %v933 = vmax.f32 %v813, 0.0
    %v934 = vmax.f32 %v815, 0.0
    %v935 = vmax.f32 %v819, 0.0
    %v936 = vmax.f32 %v821, 0.0
    %v937 = vmax.f32 %v823, 0.0
    %v938 = vmax.f32 %v825, 0.0
    %v939 = vmax.f32 %v829, 0.0
    %v940 = vmax.f32 %v831, 0.0
    %v941 = vmax.f32 %v833, 0.0
    %v942 = vmax.f32 %v835, 0.0
    %v943 = vmax.f32 %v839, 0.0
    %v944 = vmax.f32 %v841, 0.0
    %v945 = vmax.f32 %v843, 0.0
    %v946 = vmax.f32 %v845, 0.0
    %v947 = vmax.f32 %v849, 0.0
    %v948 = vmax.f32 %v851, 0.0
    %v949 = vmax.f32 %v853, 0.0
    %v950 = vmax.f32 %v855, 0.0
    %v951 = vmax.f32 %v859, 0.0
    %v952 = vmax.f32 %v861, 0.0
    %v953 = vmax.f32 %v863, 0.0
    %v954 = vmax.f32 %v865, 0.0
    %v955 = vmax.f32 %v869, 0.0
    %v956 = vmax.f32 %v871, 0.0
    %v957 = vmax.f32 %v873, 0.0
    %v958 = vmax.f32 %v875, 0.0
    %v959 = vmax.f32 %v879, 0.0
    %v960 = vmax.f32 %v881, 0.0
    %v961 = vmax.f32 %v883, 0.0
    %v962 = vmax.f32 %v885, 0.0
    %v963 = vmax.f32 %v889, 0.0
    %v964 = vmax.f32 %v891, 0.0
    %v965 = vmax.f32 %v893, 0.0
    %v966 = vmax.f32 %v895, 0.0
    %v967 = vmax.f32 %v899, 0.0
    %v968 = vmax.f32 %v901, 0.0
    %v969 = vmax.f32 %v903, 0.0
    %v970 = vmax.f32 %v905, 0.0
    %v971 = vpack.c.bf16 %v909, %v907
    %v972 = vpack.c.bf16 %v910, %v908
    %v973 = vpack.c.bf16 %v913, %v911
    %v974 = vpack.c.bf16 %v914, %v912
    %v975 = vpack.c.bf16 %v917, %v915
    %v976 = vpack.c.bf16 %v918, %v916
    %v977 = vpack.c.bf16 %v921, %v919
    %v978 = vpack.c.bf16 %v922, %v920
    %v979 = vpack.c.bf16 %v925, %v923
    %v980 = vpack.c.bf16 %v926, %v924
    %v981 = vpack.c.bf16 %v929, %v927
    %v982 = vpack.c.bf16 %v930, %v928
    %v983 = vpack.c.bf16 %v933, %v931
    %v984 = vpack.c.bf16 %v934, %v932
    %v985 = vpack.c.bf16 %v937, %v935
    %v986 = vpack.c.bf16 %v938, %v936
    %v987 = vpack.c.bf16 %v941, %v939
    %v988 = vpack.c.bf16 %v942, %v940
    %v989 = vpack.c.bf16 %v945, %v943
    %v990 = vpack.c.bf16 %v946, %v944
    %v991 = vpack.c.bf16 %v949, %v947
    %v992 = vpack.c.bf16 %v950, %v948
    %v993 = vpack.c.bf16 %v953, %v951
    %v994 = vpack.c.bf16 %v954, %v952
    %v995 = vpack.c.bf16 %v957, %v955
    %v996 = vpack.c.bf16 %v958, %v956
    %v997 = vpack.c.bf16 %v961, %v959
    %v998 = vpack.c.bf16 %v962, %v960
    %v999 = vpack.c.bf16 %v965, %v963
    %v1000 = vpack.c.bf16 %v966, %v964
    %v1001 = vpack.c.bf16 %v969, %v967
    %v1002 = vpack.c.bf16 %v970, %v968
    %v1003 = vld [vmem:[%s5] sm:$0xf]
    %v1004 = vld [vmem:[%s5 + $0x4] sm:$0xf]
    %v1005 = vld [vmem:[%s5 + $0x8] sm:$0xf]
    %v1006 = vld [vmem:[%s5 + $0xc] sm:$0xf]
    %v1007 = vld [vmem:[%s5 + $0x10] sm:$0xf]
    %v1008 = vld [vmem:[%s5 + $0x14] sm:$0xf]
    %v1009 = vld [vmem:[%s5 + $0x18] sm:$0xf]
    %v1010 = vld [vmem:[%s5 + $0x1c] sm:$0xf]
    %v1011 = vld [vmem:[%s5 + $0x20] sm:$0xf]
    %v1012 = vld [vmem:[%s5 + $0x24] sm:$0xf]
    %v1013 = vld [vmem:[%s5 + $0x28] sm:$0xf]
    %v1014 = vld [vmem:[%s5 + $0x2c] sm:$0xf]
    %v1015 = vld [vmem:[%s5 + $0x30] sm:$0xf]
    %v1016 = vld [vmem:[%s5 + $0x34] sm:$0xf]
    %v1017 = vld [vmem:[%s5 + $0x38] sm:$0xf]
    %v1018 = vld [vmem:[%s5 + $0x3c] sm:$0xf]
    %v1019 = vld [vmem:[%s5 + $0x40] sm:$0xf]
    %v1020 = vld [vmem:[%s5 + $0x44] sm:$0xf]
    %v1021 = vld [vmem:[%s5 + $0x48] sm:$0xf]
    %v1022 = vld [vmem:[%s5 + $0x4c] sm:$0xf]
    %v1023 = vld [vmem:[%s5 + $0x50] sm:$0xf]
    %v1024 = vld [vmem:[%s5 + $0x54] sm:$0xf]
    %v1025 = vld [vmem:[%s5 + $0x58] sm:$0xf]
    %v1026 = vld [vmem:[%s5 + $0x5c] sm:$0xf]
    %v1027 = vld [vmem:[%s5 + $0x60] sm:$0xf]
    %v1028 = vld [vmem:[%s5 + $0x64] sm:$0xf]
    %v1029 = vld [vmem:[%s5 + $0x68] sm:$0xf]
    %v1030 = vld [vmem:[%s5 + $0x6c] sm:$0xf]
    %v1031 = vld [vmem:[%s5 + $0x70] sm:$0xf]
    %v1032 = vld [vmem:[%s5 + $0x74] sm:$0xf]
    %v1033 = vld [vmem:[%s5 + $0x78] sm:$0xf]
    %v1034 = vld [vmem:[%s5 + $0x7c] sm:$0xf]
    %v1036 = vlaneseq
    %v1037 = vshrl.u32 %v1036, 7
    %v1038 = vsub.s32 0, %v1037
    %v1039 = vrot.slane %v64, %v1038
    %v1073 = vunpack.c.l.b16 %v1003
    %v1074 = vunpack.c.l.b16 %v1004
    %v1075 = vunpack.c.l.b16 %v1005
    %v1076 = vunpack.c.l.b16 %v1006
    %v1077 = vunpack.c.l.b16 %v1007
    %v1078 = vunpack.c.l.b16 %v1008
    %v1079 = vunpack.c.l.b16 %v1009
    %v1080 = vunpack.c.l.b16 %v1010
    %v1081 = vunpack.c.l.b16 %v1011
    %v1082 = vunpack.c.l.b16 %v1012
    %v1083 = vunpack.c.l.b16 %v1013
    %v1084 = vunpack.c.l.b16 %v1014
    %v1085 = vunpack.c.l.b16 %v1015
    %v1086 = vunpack.c.l.b16 %v1016
    %v1087 = vunpack.c.l.b16 %v1017
    %v1088 = vunpack.c.l.b16 %v1018
    %v1089 = vunpack.c.l.b16 %v1019
    %v1090 = vunpack.c.l.b16 %v1020
    %v1091 = vunpack.c.l.b16 %v1021
    %v1092 = vunpack.c.l.b16 %v1022
    %v1093 = vunpack.c.l.b16 %v1023
    %v1094 = vunpack.c.l.b16 %v1024
    %v1095 = vunpack.c.l.b16 %v1025
    %v1096 = vunpack.c.l.b16 %v1026
    %v1097 = vunpack.c.l.b16 %v1027
    %v1098 = vunpack.c.l.b16 %v1028
    %v1099 = vunpack.c.l.b16 %v1029
    %v1100 = vunpack.c.l.b16 %v1030
    %v1101 = vunpack.c.l.b16 %v1031
    %v1102 = vunpack.c.l.b16 %v1032
    %v1103 = vunpack.c.l.b16 %v1033
    %v1104 = vunpack.c.l.b16 %v1034
    %v1105 = vpack.c.b16 %v1074, %v1073
    %v1106 = vpack.c.b16 %v1076, %v1075
    %v1107 = vpack.c.b16 %v1078, %v1077
    %v1108 = vpack.c.b16 %v1080, %v1079
    %v1109 = vpack.c.b16 %v1082, %v1081
    %v1110 = vpack.c.b16 %v1084, %v1083
    %v1111 = vpack.c.b16 %v1086, %v1085
    %v1112 = vpack.c.b16 %v1088, %v1087
    %v1113 = vpack.c.b16 %v1090, %v1089
    %v1114 = vpack.c.b16 %v1092, %v1091
    %v1115 = vpack.c.b16 %v1094, %v1093
    %v1116 = vpack.c.b16 %v1096, %v1095
    %v1117 = vpack.c.b16 %v1098, %v1097
    %v1118 = vpack.c.b16 %v1100, %v1099
    %v1119 = vpack.c.b16 %v1102, %v1101
    %v1120 = vpack.c.b16 %v1104, %v1103
    %1137 = vmatprep.subr.bf16.mxu0 0
    %1138 = vmatpush1.bf16.msra.mxu0 %v1105
    %1139 = vmatprep.subr.bf16.mxu0 0
    %1140 = vmatpush1.bf16.msra.mxu0 %v1106
    %1141 = vmatprep.subr.bf16.mxu0 0
    %1142 = vmatpush1.bf16.msra.mxu0 %v1107
    %1143 = vmatprep.subr.bf16.mxu0 0
    %1144 = vmatpush1.bf16.msra.mxu0 %v1108
    %1145 = vmatprep.subr.bf16.mxu0 0
    %1146 = vmatpush1.bf16.msra.mxu0 %v1109
    %1147 = vmatprep.subr.bf16.mxu0 0
    %1148 = vmatpush1.bf16.msra.mxu0 %v1110
    %1149 = vmatprep.subr.bf16.mxu0 0
    %1150 = vmatpush1.bf16.msra.mxu0 %v1111
    %1151 = vmatprep.subr.bf16.mxu0 0
    %1152 = vmatpush1.bf16.msra.mxu0 %v1112
    %1153 = vmatprep.subr.bf16.mxu0 0
    %1154 = vmatpush1.bf16.msra.mxu0 %v1113
    %1155 = vmatprep.subr.bf16.mxu0 0
    %1156 = vmatpush1.bf16.msra.mxu0 %v1114
    %1157 = vmatprep.subr.bf16.mxu0 0
    %1158 = vmatpush1.bf16.msra.mxu0 %v1115
    %1159 = vmatprep.subr.bf16.mxu0 0
    %1160 = vmatpush1.bf16.msra.mxu0 %v1116
    %1161 = vmatprep.subr.bf16.mxu0 0
    %1162 = vmatpush1.bf16.msra.mxu0 %v1117
    %1163 = vmatprep.subr.bf16.mxu0 0
    %1164 = vmatpush1.bf16.msra.mxu0 %v1118
    %1165 = vmatprep.subr.bf16.mxu0 0
    %1166 = vmatpush1.bf16.msra.mxu0 %v1119
    %1167 = vmatprep.subr.bf16.mxu0 0
    %1168 = vmatpush1.bf16.msra.mxu0 %v1120
    %1169 = vmatprep.mubr.bf16.mxu0 %v972
    %1170 = vmatmul.mubr.bf16.gmra.mrb[0].mxu0 %v971
    %v1171 = vpop.f32.mrb[0].mxu0
    %v1172 = vadd.f32 %v1039, %v1171
    %v1173 = vpop.f32.mrb[0].mxu0
    %v1174 = vpop.f32.mrb[0].mxu0
    %v1175 = vadd.f32 %v1039, %v1174
    %v1176 = vpop.f32.mrb[0].mxu0
    %1177 = vmatprep.mubr.bf16.mxu0 %v974
    %1178 = vmatmul.mubr.bf16.gmra.mrb[0].mxu0 %v973
    %v1179 = vpop.f32.mrb[0].mxu0
    %v1180 = vadd.f32 %v1039, %v1179
    %v1181 = vpop.f32.mrb[0].mxu0
    %v1182 = vpop.f32.mrb[0].mxu0
    %v1183 = vadd.f32 %v1039, %v1182
    %v1184 = vpop.f32.mrb[0].mxu0
    %1185 = vmatprep.mubr.bf16.mxu0 %v976
    %1186 = vmatmul.mubr.bf16.gmra.mrb[0].mxu0 %v975
    %v1187 = vpop.f32.mrb[0].mxu0
    %v1188 = vadd.f32 %v1039, %v1187
    %v1189 = vpop.f32.mrb[0].mxu0
    %v1190 = vpop.f32.mrb[0].mxu0
    %v1191 = vadd.f32 %v1039, %v1190
    %v1192 = vpop.f32.mrb[0].mxu0
    %1193 = vmatprep.mubr.bf16.mxu0 %v978
    %1194 = vmatmul.mubr.bf16.gmra.mrb[0].mxu0 %v977
    %v1195 = vpop.f32.mrb[0].mxu0
    %v1196 = vadd.f32 %v1039, %v1195
    %v1197 = vpop.f32.mrb[0].mxu0
    %v1198 = vpop.f32.mrb[0].mxu0
    %v1199 = vadd.f32 %v1039, %v1198
    %v1200 = vpop.f32.mrb[0].mxu0
    %1201 = vmatprep.mubr.bf16.mxu0 %v980
    %1202 = vmatmul.mubr.bf16.gmra.mrb[0].mxu0 %v979
    %v1203 = vpop.f32.mrb[0].mxu0
    %v1204 = vadd.f32 %v1039, %v1203
    %v1205 = vpop.f32.mrb[0].mxu0
    %v1206 = vpop.f32.mrb[0].mxu0
    %v1207 = vadd.f32 %v1039, %v1206
    %v1208 = vpop.f32.mrb[0].mxu0
    %1209 = vmatprep.mubr.bf16.mxu0 %v982
    %1210 = vmatmul.mubr.bf16.gmra.mrb[0].mxu0 %v981
    %v1211 = vpop.f32.mrb[0].mxu0
    %v1212 = vadd.f32 %v1039, %v1211
    %v1213 = vpop.f32.mrb[0].mxu0
    %v1214 = vpop.f32.mrb[0].mxu0
    %v1215 = vadd.f32 %v1039, %v1214
    %v1216 = vpop.f32.mrb[0].mxu0
    %1217 = vmatprep.mubr.bf16.mxu0 %v984
    %1218 = vmatmul.mubr.bf16.gmra.mrb[0].mxu0 %v983
    %v1219 = vpop.f32.mrb[0].mxu0
    %v1220 = vadd.f32 %v1039, %v1219
    %v1221 = vpop.f32.mrb[0].mxu0
    %v1222 = vpop.f32.mrb[0].mxu0
    %v1223 = vadd.f32 %v1039, %v1222
    %v1224 = vpop.f32.mrb[0].mxu0
    %1225 = vmatprep.mubr.bf16.mxu0 %v986
    %1226 = vmatmul.mubr.bf16.gmra.mrb[0].mxu0 %v985
    %v1227 = vpop.f32.mrb[0].mxu0
    %v1228 = vadd.f32 %v1039, %v1227
    %v1229 = vpop.f32.mrb[0].mxu0
    %v1230 = vpop.f32.mrb[0].mxu0
    %v1231 = vadd.f32 %v1039, %v1230
    %v1232 = vpop.f32.mrb[0].mxu0
    %1233 = vmatprep.mubr.bf16.mxu0 %v988
    %1234 = vmatmul.mubr.bf16.gmra.mrb[0].mxu0 %v987
    %v1235 = vpop.f32.mrb[0].mxu0
    %v1236 = vadd.f32 %v1039, %v1235
    %v1237 = vpop.f32.mrb[0].mxu0
    %v1238 = vpop.f32.mrb[0].mxu0
    %v1239 = vadd.f32 %v1039, %v1238
    %v1240 = vpop.f32.mrb[0].mxu0
    %1241 = vmatprep.mubr.bf16.mxu0 %v990
    %1242 = vmatmul.mubr.bf16.gmra.mrb[0].mxu0 %v989
    %v1243 = vpop.f32.mrb[0].mxu0
    %v1244 = vadd.f32 %v1039, %v1243
    %v1245 = vpop.f32.mrb[0].mxu0
    %v1246 = vpop.f32.mrb[0].mxu0
    %v1247 = vadd.f32 %v1039, %v1246
    %v1248 = vpop.f32.mrb[0].mxu0
    %1249 = vmatprep.mubr.bf16.mxu0 %v992
    %1250 = vmatmul.mubr.bf16.gmra.mrb[0].mxu0 %v991
    %v1251 = vpop.f32.mrb[0].mxu0
    %v1252 = vadd.f32 %v1039, %v1251
    %v1253 = vpop.f32.mrb[0].mxu0
    %v1254 = vpop.f32.mrb[0].mxu0
    %v1255 = vadd.f32 %v1039, %v1254
    %v1256 = vpop.f32.mrb[0].mxu0
    %1257 = vmatprep.mubr.bf16.mxu0 %v994
    %1258 = vmatmul.mubr.bf16.gmra.mrb[0].mxu0 %v993
    %v1259 = vpop.f32.mrb[0].mxu0
    %v1260 = vadd.f32 %v1039, %v1259
    %v1261 = vpop.f32.mrb[0].mxu0
    %v1262 = vpop.f32.mrb[0].mxu0
    %v1263 = vadd.f32 %v1039, %v1262
    %v1264 = vpop.f32.mrb[0].mxu0
    %1265 = vmatprep.mubr.bf16.mxu0 %v996
    %1266 = vmatmul.mubr.bf16.gmra.mrb[0].mxu0 %v995
    %v1267 = vpop.f32.mrb[0].mxu0
    %v1268 = vadd.f32 %v1039, %v1267
    %v1269 = vpop.f32.mrb[0].mxu0
    %v1270 = vpop.f32.mrb[0].mxu0
    %v1271 = vadd.f32 %v1039, %v1270
    %v1272 = vpop.f32.mrb[0].mxu0
    %1273 = vmatprep.mubr.bf16.mxu0 %v998
    %1274 = vmatmul.mubr.bf16.gmra.mrb[0].mxu0 %v997
    %v1275 = vpop.f32.mrb[0].mxu0
    %v1276 = vadd.f32 %v1039, %v1275
    %v1277 = vpop.f32.mrb[0].mxu0
    %v1278 = vpop.f32.mrb[0].mxu0
    %v1279 = vadd.f32 %v1039, %v1278
    %v1280 = vpop.f32.mrb[0].mxu0
    %1281 = vmatprep.mubr.bf16.mxu0 %v1000
    %1282 = vmatmul.mubr.bf16.gmra.mrb[0].mxu0 %v999
    %v1283 = vpop.f32.mrb[0].mxu0
    %v1284 = vadd.f32 %v1039, %v1283
    %v1285 = vpop.f32.mrb[0].mxu0
    %v1286 = vpop.f32.mrb[0].mxu0
    %v1287 = vadd.f32 %v1039, %v1286
    %v1288 = vpop.f32.mrb[0].mxu0
    %1289 = vmatprep.mubr.bf16.mxu0 %v1002
    %1290 = vmatmul.mubr.bf16.gmra.mrb[0].mxu0 %v1001
    %v1291 = vpop.f32.mrb[0].mxu0
    %v1292 = vadd.f32 %v1039, %v1291
    %v1293 = vpop.f32.mrb[0].mxu0
    %v1294 = vpop.f32.mrb[0].mxu0
    %v1295 = vadd.f32 %v1039, %v1294
    %v1296 = vpop.f32.mrb[0].mxu0
    %1297 = vdwg.mxu0
    %v1298 = vmax.f32 %v1172, 0.0
    %v1299 = vmax.f32 %v1175, 0.0
    %v1300 = vmax.f32 %v1180, 0.0
    %v1301 = vmax.f32 %v1183, 0.0
    %v1302 = vmax.f32 %v1188, 0.0
    %v1303 = vmax.f32 %v1191, 0.0
    %v1304 = vmax.f32 %v1196, 0.0
    %v1305 = vmax.f32 %v1199, 0.0
    %v1306 = vmax.f32 %v1204, 0.0
    %v1307 = vmax.f32 %v1207, 0.0
    %v1308 = vmax.f32 %v1212, 0.0
    %v1309 = vmax.f32 %v1215, 0.0
    %v1310 = vmax.f32 %v1220, 0.0
    %v1311 = vmax.f32 %v1223, 0.0
    %v1312 = vmax.f32 %v1228, 0.0
    %v1313 = vmax.f32 %v1231, 0.0
    %v1314 = vmax.f32 %v1236, 0.0
    %v1315 = vmax.f32 %v1239, 0.0
    %v1316 = vmax.f32 %v1244, 0.0
    %v1317 = vmax.f32 %v1247, 0.0
    %v1318 = vmax.f32 %v1252, 0.0
    %v1319 = vmax.f32 %v1255, 0.0
    %v1320 = vmax.f32 %v1260, 0.0
    %v1321 = vmax.f32 %v1263, 0.0
    %v1322 = vmax.f32 %v1268, 0.0
    %v1323 = vmax.f32 %v1271, 0.0
    %v1324 = vmax.f32 %v1276, 0.0
    %v1325 = vmax.f32 %v1279, 0.0
    %v1326 = vmax.f32 %v1284, 0.0
    %v1327 = vmax.f32 %v1287, 0.0
    %v1328 = vmax.f32 %v1292, 0.0
    %v1329 = vmax.f32 %v1295, 0.0
    %v1330 = vpack.c.bf16 %v1299, %v1298
    %v1331 = vpack.c.bf16 %v1301, %v1300
    %v1332 = vpack.c.bf16 %v1303, %v1302
    %v1333 = vpack.c.bf16 %v1305, %v1304
    %v1334 = vpack.c.bf16 %v1307, %v1306
    %v1335 = vpack.c.bf16 %v1309, %v1308
    %v1336 = vpack.c.bf16 %v1311, %v1310
    %v1337 = vpack.c.bf16 %v1313, %v1312
    %v1338 = vpack.c.bf16 %v1315, %v1314
    %v1339 = vpack.c.bf16 %v1317, %v1316
    %v1340 = vpack.c.bf16 %v1319, %v1318
    %v1341 = vpack.c.bf16 %v1321, %v1320
    %v1342 = vpack.c.bf16 %v1323, %v1322
    %v1343 = vpack.c.bf16 %v1325, %v1324
    %v1344 = vpack.c.bf16 %v1327, %v1326
    %v1345 = vpack.c.bf16 %v1329, %v1328
    %v1346 = vld [vmem:[#allocation5] sm:$0xf]
    %v1347 = vld [vmem:[#allocation5 + $0x4] sm:$0xf]
    %v1348 = vld [vmem:[#allocation5 + $0x8] sm:$0xf]
    %v1349 = vld [vmem:[#allocation5 + $0xc] sm:$0xf]
    %v1350 = vld [vmem:[#allocation5 + $0x10] sm:$0xf]
    %v1351 = vld [vmem:[#allocation5 + $0x14] sm:$0xf]
    %v1352 = vld [vmem:[#allocation5 + $0x18] sm:$0xf]
    %v1353 = vld [vmem:[#allocation5 + $0x1c] sm:$0xf]
    %v1354 = vld [vmem:[#allocation5 + $0x20] sm:$0xf]
    %v1355 = vld [vmem:[#allocation5 + $0x24] sm:$0xf]
    %v1356 = vld [vmem:[#allocation5 + $0x28] sm:$0xf]
    %v1357 = vld [vmem:[#allocation5 + $0x2c] sm:$0xf]
    %v1358 = vld [vmem:[#allocation5 + $0x30] sm:$0xf]
    %v1359 = vld [vmem:[#allocation5 + $0x34] sm:$0xf]
    %v1360 = vld [vmem:[#allocation5 + $0x38] sm:$0xf]
    %v1361 = vld [vmem:[#allocation5 + $0x3c] sm:$0xf]
    %v1363 = vlaneseq
    %v1364 = vshrl.u32 %v1363, 7
    %v1365 = vsub.s32 0, %v1364
    %v1366 = vrot.slane %v65, %v1365
    %v1384 = vunpack.c.l.b16 %v1346
    %v1385 = vunpack.c.l.b16 %v1347
    %v1386 = vunpack.c.l.b16 %v1348
    %v1387 = vunpack.c.l.b16 %v1349
    %v1388 = vunpack.c.l.b16 %v1350
    %v1389 = vunpack.c.l.b16 %v1351
    %v1390 = vunpack.c.l.b16 %v1352
    %v1391 = vunpack.c.l.b16 %v1353
    %v1392 = vunpack.c.l.b16 %v1354
    %v1393 = vunpack.c.l.b16 %v1355
    %v1394 = vunpack.c.l.b16 %v1356
    %v1395 = vunpack.c.l.b16 %v1357
    %v1396 = vunpack.c.l.b16 %v1358
    %v1397 = vunpack.c.l.b16 %v1359
    %v1398 = vunpack.c.l.b16 %v1360
    %v1399 = vunpack.c.l.b16 %v1361
    %v1400 = vpack.c.b16 %v1385, %v1384
    %v1401 = vpack.c.b16 %v1387, %v1386
    %v1402 = vpack.c.b16 %v1389, %v1388
    %v1403 = vpack.c.b16 %v1391, %v1390
    %v1404 = vpack.c.b16 %v1393, %v1392
    %v1405 = vpack.c.b16 %v1395, %v1394
    %v1406 = vpack.c.b16 %v1397, %v1396
    %v1407 = vpack.c.b16 %v1399, %v1398
    %1416 = vmatprep.subr.bf16.mxu0 0
    %1417 = vmatpush1.bf16.msra.mxu0 %v1400
    %1418 = vmatprep.subr.bf16.mxu0 0
    %1419 = vmatpush1.bf16.msra.mxu0 %v1401
    %1420 = vmatprep.subr.bf16.mxu0 0
    %1421 = vmatpush1.bf16.msra.mxu0 %v1402
    %1422 = vmatprep.subr.bf16.mxu0 0
    %1423 = vmatpush1.bf16.msra.mxu0 %v1403
    %1424 = vmatprep.subr.bf16.mxu0 0
    %1425 = vmatpush1.bf16.msra.mxu0 %v1404
    %1426 = vmatprep.subr.bf16.mxu0 0
    %1427 = vmatpush1.bf16.msra.mxu0 %v1405
    %1428 = vmatprep.subr.bf16.mxu0 0
    %1429 = vmatpush1.bf16.msra.mxu0 %v1406
    %1430 = vmatprep.subr.bf16.mxu0 0
    %1431 = vmatpush1.bf16.msra.mxu0 %v1407
    %1432 = vmatprep.subr.bf16.mxu0 0
    %1433 = vmatpush1.bf16.msra.mxu0 0
    %1434 = vmatprep.subr.bf16.mxu0 0
    %1435 = vmatpush1.bf16.msra.mxu0 0
    %1436 = vmatprep.subr.bf16.mxu0 0
    %1437 = vmatpush1.bf16.msra.mxu0 0
    %1438 = vmatprep.subr.bf16.mxu0 0
    %1439 = vmatpush1.bf16.msra.mxu0 0
    %1440 = vmatprep.subr.bf16.mxu0 0
    %1441 = vmatpush1.bf16.msra.mxu0 0
    %1442 = vmatprep.subr.bf16.mxu0 0
    %1443 = vmatpush1.bf16.msra.mxu0 0
    %1444 = vmatprep.subr.bf16.mxu0 0
    %1445 = vmatpush1.bf16.msra.mxu0 0
    %1446 = vmatprep.subr.bf16.mxu0 0
    %1447 = vmatpush1.bf16.msra.mxu0 0
    %1448 = vmatprep.mubr.bf16.mxu0 0
    %1449 = vmatmul.mubr.bf16.gmra.mrb[0].mxu0 %v1330
    %v1450 = vpop.f32.mrb[0].mxu0
    %v1451 = vadd.f32 %v1366, %v1450
    %v1452 = vpop.f32.mrb[0].mxu0
    %v1453 = vpop.f32.mrb[0].mxu0
    %v1454 = vadd.f32 %v1366, %v1453
    %v1455 = vpop.f32.mrb[0].mxu0
    %1456 = vmatprep.mubr.bf16.mxu0 0
    %1457 = vmatmul.mubr.bf16.gmra.mrb[0].mxu0 %v1331
    %v1458 = vpop.f32.mrb[0].mxu0
    %v1459 = vadd.f32 %v1366, %v1458
    %v1460 = vpop.f32.mrb[0].mxu0
    %v1461 = vpop.f32.mrb[0].mxu0
    %v1462 = vadd.f32 %v1366, %v1461
    %v1463 = vpop.f32.mrb[0].mxu0
    %1464 = vmatprep.mubr.bf16.mxu0 0
    %1465 = vmatmul.mubr.bf16.gmra.mrb[0].mxu0 %v1332
    %v1466 = vpop.f32.mrb[0].mxu0
    %v1467 = vadd.f32 %v1366, %v1466
    %v1468 = vpop.f32.mrb[0].mxu0
    %v1469 = vpop.f32.mrb[0].mxu0
    %v1470 = vadd.f32 %v1366, %v1469
    %v1471 = vpop.f32.mrb[0].mxu0
    %1472 = vmatprep.mubr.bf16.mxu0 0
    %1473 = vmatmul.mubr.bf16.gmra.mrb[0].mxu0 %v1333
    %v1474 = vpop.f32.mrb[0].mxu0
    %v1475 = vadd.f32 %v1366, %v1474
    %v1476 = vpop.f32.mrb[0].mxu0
    %v1477 = vpop.f32.mrb[0].mxu0
    %v1478 = vadd.f32 %v1366, %v1477
    %v1479 = vpop.f32.mrb[0].mxu0
    %1480 = vmatprep.mubr.bf16.mxu0 0
    %1481 = vmatmul.mubr.bf16.gmra.mrb[0].mxu0 %v1334
    %v1482 = vpop.f32.mrb[0].mxu0
    %v1483 = vadd.f32 %v1366, %v1482
    %v1484 = vpop.f32.mrb[0].mxu0
    %v1485 = vpop.f32.mrb[0].mxu0
    %v1486 = vadd.f32 %v1366, %v1485
    %v1487 = vpop.f32.mrb[0].mxu0
    %1488 = vmatprep.mubr.bf16.mxu0 0
    %1489 = vmatmul.mubr.bf16.gmra.mrb[0].mxu0 %v1335
    %v1490 = vpop.f32.mrb[0].mxu0
    %v1491 = vadd.f32 %v1366, %v1490
    %v1492 = vpop.f32.mrb[0].mxu0
    %v1493 = vpop.f32.mrb[0].mxu0
    %v1494 = vadd.f32 %v1366, %v1493
    %v1495 = vpop.f32.mrb[0].mxu0
    %1496 = vmatprep.mubr.bf16.mxu0 0
    %1497 = vmatmul.mubr.bf16.gmra.mrb[0].mxu0 %v1336
    %v1498 = vpop.f32.mrb[0].mxu0
    %v1499 = vadd.f32 %v1366, %v1498
    %v1500 = vpop.f32.mrb[0].mxu0
    %v1501 = vpop.f32.mrb[0].mxu0
    %v1502 = vadd.f32 %v1366, %v1501
    %v1503 = vpop.f32.mrb[0].mxu0
    %1504 = vmatprep.mubr.bf16.mxu0 0
    %1505 = vmatmul.mubr.bf16.gmra.mrb[0].mxu0 %v1337
    %v1506 = vpop.f32.mrb[0].mxu0
    %v1507 = vadd.f32 %v1366, %v1506
    %v1508 = vpop.f32.mrb[0].mxu0
    %v1509 = vpop.f32.mrb[0].mxu0
    %v1510 = vadd.f32 %v1366, %v1509
    %v1511 = vpop.f32.mrb[0].mxu0
    %1512 = vmatprep.mubr.bf16.mxu0 0
    %1513 = vmatmul.mubr.bf16.gmra.mrb[0].mxu0 %v1338
    %v1514 = vpop.f32.mrb[0].mxu0
    %v1515 = vadd.f32 %v1366, %v1514
    %v1516 = vpop.f32.mrb[0].mxu0
    %v1517 = vpop.f32.mrb[0].mxu0
    %v1518 = vadd.f32 %v1366, %v1517
    %v1519 = vpop.f32.mrb[0].mxu0
    %1520 = vmatprep.mubr.bf16.mxu0 0
    %1521 = vmatmul.mubr.bf16.gmra.mrb[0].mxu0 %v1339
    %v1522 = vpop.f32.mrb[0].mxu0
    %v1523 = vadd.f32 %v1366, %v1522
    %v1524 = vpop.f32.mrb[0].mxu0
    %v1525 = vpop.f32.mrb[0].mxu0
    %v1526 = vadd.f32 %v1366, %v1525
    %v1527 = vpop.f32.mrb[0].mxu0
    %1528 = vmatprep.mubr.bf16.mxu0 0
    %1529 = vmatmul.mubr.bf16.gmra.mrb[0].mxu0 %v1340
    %v1530 = vpop.f32.mrb[0].mxu0
    %v1531 = vadd.f32 %v1366, %v1530
    %v1532 = vpop.f32.mrb[0].mxu0
    %v1533 = vpop.f32.mrb[0].mxu0
    %v1534 = vadd.f32 %v1366, %v1533
    %v1535 = vpop.f32.mrb[0].mxu0
    %1536 = vmatprep.mubr.bf16.mxu0 0
    %1537 = vmatmul.mubr.bf16.gmra.mrb[0].mxu0 %v1341
    %v1538 = vpop.f32.mrb[0].mxu0
    %v1539 = vadd.f32 %v1366, %v1538
    %v1540 = vpop.f32.mrb[0].mxu0
    %v1541 = vpop.f32.mrb[0].mxu0
    %v1542 = vadd.f32 %v1366, %v1541
    %v1543 = vpop.f32.mrb[0].mxu0
    %1544 = vmatprep.mubr.bf16.mxu0 0
    %1545 = vmatmul.mubr.bf16.gmra.mrb[0].mxu0 %v1342
    %v1546 = vpop.f32.mrb[0].mxu0
    %v1547 = vadd.f32 %v1366, %v1546
    %v1548 = vpop.f32.mrb[0].mxu0
    %v1549 = vpop.f32.mrb[0].mxu0
    %v1550 = vadd.f32 %v1366, %v1549
    %v1551 = vpop.f32.mrb[0].mxu0
    %1552 = vmatprep.mubr.bf16.mxu0 0
    %1553 = vmatmul.mubr.bf16.gmra.mrb[0].mxu0 %v1343
    %v1554 = vpop.f32.mrb[0].mxu0
    %v1555 = vadd.f32 %v1366, %v1554
    %v1556 = vpop.f32.mrb[0].mxu0
    %v1557 = vpop.f32.mrb[0].mxu0
    %v1558 = vadd.f32 %v1366, %v1557
    %v1559 = vpop.f32.mrb[0].mxu0
    %1560 = vmatprep.mubr.bf16.mxu0 0
    %1561 = vmatmul.mubr.bf16.gmra.mrb[0].mxu0 %v1344
    %v1562 = vpop.f32.mrb[0].mxu0
    %v1563 = vadd.f32 %v1366, %v1562
    %v1564 = vpop.f32.mrb[0].mxu0
    %v1565 = vpop.f32.mrb[0].mxu0
    %v1566 = vadd.f32 %v1366, %v1565
    %v1567 = vpop.f32.mrb[0].mxu0
    %1568 = vmatprep.mubr.bf16.mxu0 0
    %1569 = vmatmul.mubr.bf16.gmra.mrb[0].mxu0 %v1345
    %v1570 = vpop.f32.mrb[0].mxu0
    %v1571 = vadd.f32 %v1366, %v1570
    %v1572 = vpop.f32.mrb[0].mxu0
    %v1573 = vpop.f32.mrb[0].mxu0
    %v1574 = vadd.f32 %v1366, %v1573
    %v1575 = vpop.f32.mrb[0].mxu0
    %1576 = vdwg.mxu0
    %1577 = vxpose.xlu0.b32.start [1/16] %v1451, 128
    %1578 = vxpose.xlu0.b32.cont [2/16] %v1454, 128
    %1579 = vxpose.xlu0.b32.cont [3/16] %v1459, 128
    %1580 = vxpose.xlu0.b32.cont [4/16] %v1462, 128
    %1581 = vxpose.xlu0.b32.cont [5/16] %v1467, 128
    %1582 = vxpose.xlu0.b32.cont [6/16] %v1470, 128
    %1583 = vxpose.xlu0.b32.cont [7/16] %v1475, 128
    %1584 = vxpose.xlu0.b32.cont [8/16] %v1478, 128
    %1585 = vxpose.xlu0.b32.cont [9/16] %v1483, 128
    %1586 = vxpose.xlu0.b32.cont [10/16] %v1486, 128
    %1587 = vxpose.xlu0.b32.cont [11/16] %v1491, 128
    %1588 = vxpose.xlu0.b32.cont [12/16] %v1494, 128
    %1589 = vxpose.xlu0.b32.cont [13/16] %v1499, 128
    %1590 = vxpose.xlu0.b32.cont [14/16] %v1502, 128
    %1591 = vxpose.xlu0.b32.cont [15/16] %v1507, 128
    %1592 = vxpose.xlu0.b32.end [16/16] %v1510, 128
    %v1593 = vpop.trf.xlu0
    %v1594 = vpop.trf.xlu0
    %v1595 = vpop.trf.xlu0
    %v1596 = vpop.trf.xlu0
    %v1597 = vpop.trf.xlu0
    %v1598 = vpop.trf.xlu0
    %v1599 = vpop.trf.xlu0
    %v1600 = vpop.trf.xlu0
    %v1601 = vpop.trf.xlu0
    %v1602 = vpop.trf.xlu0
    %v1603 = vpop.trf.xlu0
    %v1604 = vpop.trf.xlu0
    %v1605 = vpop.trf.xlu0
    %v1606 = vpop.trf.xlu0
    %v1607 = vpop.trf.xlu0
    %v1608 = vpop.trf.xlu0
    %1609 = vxpose.xlu0.b32.start [1/16] %v1515, 128
    %1610 = vxpose.xlu0.b32.cont [2/16] %v1518, 128
    %1611 = vxpose.xlu0.b32.cont [3/16] %v1523, 128
    %1612 = vxpose.xlu0.b32.cont [4/16] %v1526, 128
    %1613 = vxpose.xlu0.b32.cont [5/16] %v1531, 128
    %1614 = vxpose.xlu0.b32.cont [6/16] %v1534, 128
    %1615 = vxpose.xlu0.b32.cont [7/16] %v1539, 128
    %1616 = vxpose.xlu0.b32.cont [8/16] %v1542, 128
    %1617 = vxpose.xlu0.b32.cont [9/16] %v1547, 128
    %1618 = vxpose.xlu0.b32.cont [10/16] %v1550, 128
    %1619 = vxpose.xlu0.b32.cont [11/16] %v1555, 128
    %1620 = vxpose.xlu0.b32.cont [12/16] %v1558, 128
    %1621 = vxpose.xlu0.b32.cont [13/16] %v1563, 128
    %1622 = vxpose.xlu0.b32.cont [14/16] %v1566, 128
    %1623 = vxpose.xlu0.b32.cont [15/16] %v1571, 128
    %1624 = vxpose.xlu0.b32.end [16/16] %v1574, 128
    %v1625 = vpop.trf.xlu0
    %v1626 = vpop.trf.xlu0
    %v1627 = vpop.trf.xlu0
    %v1628 = vpop.trf.xlu0
    %v1629 = vpop.trf.xlu0
    %v1630 = vpop.trf.xlu0
    %v1631 = vpop.trf.xlu0
    %v1632 = vpop.trf.xlu0
    %v1633 = vpop.trf.xlu0
    %v1634 = vpop.trf.xlu0
    %v1635 = vpop.trf.xlu0
    %v1636 = vpop.trf.xlu0
    %v1637 = vpop.trf.xlu0
    %v1638 = vpop.trf.xlu0
    %v1639 = vpop.trf.xlu0
    %v1640 = vpop.trf.xlu0
    %1641 = vst [vmem:[#allocation7] sm:$0xff] %v1593
    %1642 = vst [vmem:[#allocation7 + $0x8] sm:$0xff] %v1625
    // Predicated region
    $region46: #{tpu_custom_call.1} parent=1 // pred_check
      _
    $region47: #{tpu_custom_call.1} parent=1 // pred_check_branch
      %1644 = sbr.rel (0) target = $region49
    $region48: #{tpu_custom_call.1} parent=1 // pred_region
      %s1646 = ssub.s32 256, 256
      %1647 = vsyncadd [#allocation4], %s1646
      %s1649 = sshll.u32 [#allocation7], 4
      %s1650 = int_to_ptr.vmem [resolvable:$true] %s1649
      %1652 = dma.vmem_to_hbm [thread:$0]  %s1650, 256, %s9, [#allocation4]
    $region49: #{tpu_custom_call.1} parent=1 // pred_fallthru
      _
    // Predicated region
    $region50: #{tpu_custom_call.1} parent=1 // pred_check
      _
    $region51: #{tpu_custom_call.1} parent=1 // pred_check_branch
      %1654 = sbr.rel (0) target = $region53
    $region52: #{tpu_custom_call.1} parent=1 // pred_region
      %1655 = dma.done [#allocation4], 256
    $region53: #{tpu_custom_call.1} parent=1 // pred_fallthru
      _
    %1656 = vsyncpa [#allocation3], 1
    %1657 = vsyncpa [#allocation6], 1
    %1658 = vsyncpa [#allocation4], 1

</llo_original>
